<compile_context>
chip_gen: v7x
topology: tpu7x:2x2x1
jax: 0.10.0
libtpu: 0.0.40
codegen_flags: <defaults>
</compile_context>

<pallas_src>
import functools

import jax
import jax.numpy as jnp
from jax import lax
from jax.experimental import pallas as pl
from jax.experimental.pallas import tpu as pltpu

LANE = 128


def _round_up(n, m):
    return ((n + m - 1) // m) * m


def corner3d_loss_kernel(len_ref,        # SMEM prefetch: (B,) i32 target counts
                         logits_ref,     # (1, 1, Qp) f32
                         coords_ref,     # (1, Qp, 4) f32  (x, y, z, 0)
                         tgt_all_ref,    # (1, Tp, 4) f32  (x, y, z, label)
                         src_idx_ref,    # (1, Tp, 1) i32  matched query index
                         tgt_idx_ref,    # (1, Tp, 1) i32  matched target index
                         out_ref,        # SMEM (6,) f32 final losses
                         acc_diff_ref,   # VMEM (Tp, 4) f32
                         acc_bce_ref,    # VMEM (1, Qp) f32
                         acc_focal_ref,  # VMEM (1, Qp) f32
                         acc_card_ref,   # VMEM (1, 1) f32
                         acc_len_ref,    # VMEM (1, 1) f32
                         *, q_orig, inv_bq, inv_b):
    b = pl.program_id(0)
    Tp = src_idx_ref.shape[1]
    Qp = logits_ref.shape[-1]

    @pl.when(b == 0)
    def _init():
        acc_diff_ref[...] = jnp.zeros_like(acc_diff_ref)
        acc_bce_ref[...] = jnp.zeros_like(acc_bce_ref)
        acc_focal_ref[...] = jnp.zeros_like(acc_focal_ref)
        acc_card_ref[...] = jnp.zeros_like(acc_card_ref)
        acc_len_ref[...] = jnp.zeros_like(acc_len_ref)

    n_b = len_ref[b]                               # i32 scalar (SMEM)
    len_f = n_b.astype(jnp.float32)

    # ---- masked one-hot selection matrices, built once per image ----
    src_col = src_idx_ref[0]                       # (Tp, 1) i32
    tgt_col = tgt_idx_ref[0]                       # (Tp, 1) i32
    t_iota = lax.broadcasted_iota(jnp.int32, (Tp, 1), 0)
    valid_col = (t_iota < n_b).astype(jnp.float32)                 # (Tp, 1)

    q_iota = lax.broadcasted_iota(jnp.int32, (Tp, Qp), 1)
    sel_src = jnp.where(src_col == q_iota, valid_col, 0.0)         # (Tp, Qp)
    k_iota = lax.broadcasted_iota(jnp.int32, (Tp, Tp), 1)
    sel_tgt = jnp.where(tgt_col == k_iota, valid_col, 0.0)         # (Tp, Tp)

    # ---- gather matched predictions / targets via MXU contractions ----
    dn = (((1,), (0,)), ((), ()))
    src_g = lax.dot_general(sel_src, coords_ref[0], dn,
                            preferred_element_type=jnp.float32)    # (Tp, 4)
    tgt_g = lax.dot_general(sel_tgt, tgt_all_ref[0], dn,
                            preferred_element_type=jnp.float32)    # (Tp, 4)
    # column 3 of the diff (|0 - gathered_label|) is never read at finalize
    acc_diff_ref[...] += jnp.abs(src_g - tgt_g)

    # ---- scatter gathered labels back onto the query axis ----
    labels_g = tgt_g[:, 3:4]                                       # (Tp, 1)
    z = jnp.sum(sel_src * labels_g, axis=0, keepdims=True)         # (1, Qp)

    # ---- classification / cardinality terms (all lane-dense rows) ----
    x = logits_ref[0]                                              # (1, Qp)
    bce = jnp.maximum(x, 0.0) - x * z + jnp.log1p(jnp.exp(-jnp.abs(x)))
    p = jax.nn.sigmoid(x)
    omp = 1.0 - p
    focal = 0.25 * z * omp * omp + 0.75 * (1.0 - z) * p * p
    matched = (x > 0.0).astype(jnp.float32)        # == sigmoid(x) > 0.5

    if q_orig < Qp:   # mask padded query lanes only when padding exists
        q_iota_row = lax.broadcasted_iota(jnp.int32, (1, Qp), 1)
        q_valid = (q_iota_row < q_orig).astype(jnp.float32)
        bce = bce * q_valid
        focal = focal * q_valid
        matched = matched * q_valid

    acc_bce_ref[...] += bce
    acc_focal_ref[...] += focal
    acc_card_ref[...] += jnp.abs(jnp.sum(matched) - len_f)
    acc_len_ref[...] += len_f

    # ---- finalize on the last image ----
    @pl.when(b == pl.num_programs(0) - 1)
    def _finalize():
        d = acc_diff_ref[...]
        # clamp only guards the degenerate zero-target batch
        denom = jnp.maximum(jnp.sum(acc_len_ref[...]), 1.0)
        inv_d = 1.0 / denom
        loss_x = jnp.sum(d[:, 0:1]) * inv_d
        loss_y = jnp.sum(d[:, 1:2]) * inv_d
        loss_z = jnp.sum(d[:, 2:3]) * inv_d
        mean_bce = jnp.sum(acc_bce_ref[...]) * inv_bq
        mean_focal = jnp.sum(acc_focal_ref[...]) * inv_bq
        loss_labels = mean_focal * mean_bce        # matches reference: mean(focal)*mean(bce)
        loss_card = jnp.sum(acc_card_ref[...]) * inv_b
        out_ref[0] = loss_z          # loss_3dcenter
        out_ref[1] = loss_labels     # loss_labels
        out_ref[2] = loss_card       # loss_cardinality
        out_ref[3] = loss_z          # loss_height (same z formula as 3dcenter)
        out_ref[4] = loss_x          # loss_x
        out_ref[5] = loss_y          # loss_y


def corner3d_criterion(corner_logits, corner_coord, tgt_coords, tgt_labels,
                       tgt_len, src_idx, tgt_idx):
    """Returns (loss_3dcenter, loss_labels, loss_cardinality, loss_height, loss_x, loss_y)."""
    B, Q, _ = corner_logits.shape
    T = tgt_coords.shape[1]
    Qp = _round_up(Q, LANE)
    Tp = _round_up(T, LANE)
    f32 = jnp.float32

    # Host prep = pads / concat only (no transposes): lane dims -> 128 multiples.
    logits_p = jnp.pad(corner_logits.astype(f32).reshape(B, 1, Q),
                       ((0, 0), (0, 0), (0, Qp - Q)))               # (B, 1, Qp)
    coords_p = jnp.pad(corner_coord.astype(f32),
                       ((0, 0), (0, Qp - Q), (0, 1)))               # (B, Qp, 4)
    tgt_all = jnp.concatenate(
        [tgt_coords.astype(f32), tgt_labels.astype(f32)[..., None]], axis=-1)
    tgt_all_p = jnp.pad(tgt_all, ((0, 0), (0, Tp - T), (0, 0)))     # (B, Tp, 4)
    sidx_p = jnp.pad(src_idx.astype(jnp.int32).reshape(B, T, 1),
                     ((0, 0), (0, Tp - T), (0, 0)))                 # (B, Tp, 1)
    tidx_p = jnp.pad(tgt_idx.astype(jnp.int32).reshape(B, T, 1),
                     ((0, 0), (0, Tp - T), (0, 0)))                 # (B, Tp, 1)
    lens = tgt_len.reshape(B).astype(jnp.int32)                     # (B,)

    kernel = functools.partial(corner3d_loss_kernel,
                               q_orig=Q,
                               inv_bq=1.0 / float(B * Q),
                               inv_b=1.0 / float(B))

    grid_spec = pltpu.PrefetchScalarGridSpec(
        num_scalar_prefetch=1,
        grid=(B,),
        in_specs=[
            pl.BlockSpec((1, 1, Qp), lambda b, L: (b, 0, 0)),   # logits
            pl.BlockSpec((1, Qp, 4), lambda b, L: (b, 0, 0)),   # pred coords
            pl.BlockSpec((1, Tp, 4), lambda b, L: (b, 0, 0)),   # tgt coords+label
            pl.BlockSpec((1, Tp, 1), lambda b, L: (b, 0, 0)),   # src_idx
            pl.BlockSpec((1, Tp, 1), lambda b, L: (b, 0, 0)),   # tgt_idx
        ],
        out_specs=pl.BlockSpec(memory_space=pltpu.MemorySpace.SMEM),
        scratch_shapes=[
            pltpu.VMEM((Tp, 4), f32),   # |pred - tgt| accumulator
            pltpu.VMEM((1, Qp), f32),   # bce accumulator
            pltpu.VMEM((1, Qp), f32),   # focal-weight accumulator
            pltpu.VMEM((1, 1), f32),    # cardinality-error accumulator
            pltpu.VMEM((1, 1), f32),    # target-length accumulator
        ],
    )

    out = pl.pallas_call(
        kernel,
        out_shape=jax.ShapeDtypeStruct((6,), f32),
        grid_spec=grid_spec,
        compiler_params=pltpu.CompilerParams(
            dimension_semantics=("arbitrary",),   # B axis carries accumulators
            vmem_limit_bytes=32 * 1024 * 1024,
        ),
    )(lens, logits_p, coords_p, tgt_all_p, sidx_p, tidx_p)

    return tuple(out)


if __name__ == "__main__":
    key = jax.random.PRNGKey(0)
    B, Q, T = 2, 16, 8

    k1, k2, k3 = jax.random.split(key, 3)
    corner_logits = jax.random.normal(k1, (B, Q, 1), dtype=jnp.float32)
    corner_coord = jax.random.uniform(k2, (B, Q, 3), dtype=jnp.float32)

    # padded targets: each image has tgt_len[b] valid corners
    tgt_len = jnp.array([5, 3], dtype=jnp.int32)
    tgt_coords = jax.random.uniform(k3, (B, T, 3), dtype=jnp.float32)
    tgt_labels = jnp.ones((B, T), dtype=jnp.float32)   # single positive class

    # deterministic "matcher" output (unique query per valid target slot)
    t_ids = jnp.arange(T, dtype=jnp.int32)
    src_idx = (t_ids[None, :] * 2 + jnp.arange(B, dtype=jnp.int32)[:, None]) % Q
    tgt_idx = jnp.tile(t_ids[None, :], (B, 1))

    losses = corner3d_criterion(corner_logits, corner_coord, tgt_coords,
                                tgt_labels, tgt_len, src_idx, tgt_idx)
    losses = jax.block_until_ready(losses)

    names = ("loss_3dcenter", "loss_labels", "loss_cardinality",
             "loss_height", "loss_x", "loss_y")
    for n, v in zip(names, losses):
        assert jnp.isfinite(v), f"{n} is not finite"
    print("KERNEL_OK")
</pallas_src>

<mosaic_0001>
module attributes {stable_mosaic.version = 11 : i64} {
  func.func @corner3d_loss_kernel(%arg0: i32, %arg1: memref<2xi32, #tpu.memory_space<smem>>, %arg2: memref<1x1x128xf32, #tpu.memory_space<vmem>>, %arg3: memref<1x128x4xf32, #tpu.memory_space<vmem>>, %arg4: memref<1x128x4xf32, #tpu.memory_space<vmem>>, %arg5: memref<1x128x1xi32, #tpu.memory_space<vmem>>, %arg6: memref<1x128x1xi32, #tpu.memory_space<vmem>>, %arg7: memref<6xf32, #tpu.memory_space<smem>>, %arg8: memref<128x4xf32, #tpu.memory_space<vmem>>, %arg9: memref<1x128xf32, #tpu.memory_space<vmem>>, %arg10: memref<1x128xf32, #tpu.memory_space<vmem>>, %arg11: memref<1x1xf32, #tpu.memory_space<vmem>>, %arg12: memref<1x1xf32, #tpu.memory_space<vmem>>) attributes {dimension_semantics = [#tpu.dimension_semantics<arbitrary>], iteration_bounds = array<i64: 2>, scalar_prefetch = 1 : i64, scratch_operands = 5 : i64, tpu.core_type = #tpu.core_type<tc>, window_params = [{transform_indices = @transform_0, window_bounds = array<i64: 1, 1, 128>}, {transform_indices = @transform_1, window_bounds = array<i64: 1, 128, 4>}, {transform_indices = @transform_2, window_bounds = array<i64: 1, 128, 4>}, {transform_indices = @transform_3, window_bounds = array<i64: 1, 128, 1>}, {transform_indices = @transform_4, window_bounds = array<i64: 1, 128, 1>}, {transform_indices = @transform_5, window_bounds = array<i64: 6>}]} {
    %c0_i32 = arith.constant 0 : i32
    %0 = arith.cmpi eq, %arg0, %c0_i32 : i32
    %1 = arith.extui %0 : i1 to i32
    %c0_i32_0 = arith.constant 0 : i32
    %2 = arith.cmpi ne, %1, %c0_i32_0 : i32
    scf.if %2 {
      %cst_49 = arith.constant 0.000000e+00 : f32
      %110 = vector.broadcast %cst_49 : f32 to vector<128x4xf32>
      %c0_50 = arith.constant 0 : index
      %c0_51 = arith.constant 0 : index
      %111 = vector.load %arg8[%c0_50, %c0_51] : memref<128x4xf32, #tpu.memory_space<vmem>>, vector<128x4xf32>
      tpu.vector_store %arg8[%c0_50, %c0_51], %110 {strides = array<i32>} : memref<128x4xf32, #tpu.memory_space<vmem>>, vector<128x4xf32>,
      %cst_52 = arith.constant 0.000000e+00 : f32
      %112 = vector.broadcast %cst_52 : f32 to vector<1x128xf32>
      %c0_53 = arith.constant 0 : index
      %c0_54 = arith.constant 0 : index
      %113 = vector.load %arg9[%c0_53, %c0_54] : memref<1x128xf32, #tpu.memory_space<vmem>>, vector<1x128xf32>
      tpu.vector_store %arg9[%c0_53, %c0_54], %112 {strides = array<i32>} : memref<1x128xf32, #tpu.memory_space<vmem>>, vector<1x128xf32>,
      %cst_55 = arith.constant 0.000000e+00 : f32
      %114 = vector.broadcast %cst_55 : f32 to vector<1x128xf32>
      %c0_56 = arith.constant 0 : index
      %c0_57 = arith.constant 0 : index
      %115 = vector.load %arg10[%c0_56, %c0_57] : memref<1x128xf32, #tpu.memory_space<vmem>>, vector<1x128xf32>
      tpu.vector_store %arg10[%c0_56, %c0_57], %114 {strides = array<i32>} : memref<1x128xf32, #tpu.memory_space<vmem>>, vector<1x128xf32>,
      %cst_58 = arith.constant 0.000000e+00 : f32
      %116 = vector.broadcast %cst_58 : f32 to vector<1x1xf32>
      %c0_59 = arith.constant 0 : index
      %c0_60 = arith.constant 0 : index
      %117 = vector.load %arg11[%c0_59, %c0_60] : memref<1x1xf32, #tpu.memory_space<vmem>>, vector<1x1xf32>
      tpu.vector_store %arg11[%c0_59, %c0_60], %116 {strides = array<i32>} : memref<1x1xf32, #tpu.memory_space<vmem>>, vector<1x1xf32>,
      %cst_61 = arith.constant 0.000000e+00 : f32
      %118 = vector.broadcast %cst_61 : f32 to vector<1x1xf32>
      %c0_62 = arith.constant 0 : index
      %c0_63 = arith.constant 0 : index
      %119 = vector.load %arg12[%c0_62, %c0_63] : memref<1x1xf32, #tpu.memory_space<vmem>>, vector<1x1xf32>
      tpu.vector_store %arg12[%c0_62, %c0_63], %118 {strides = array<i32>} : memref<1x1xf32, #tpu.memory_space<vmem>>, vector<1x1xf32>,
    } else {
    }
    %3 = arith.index_cast %arg0 : i32 to index
    %4 = memref.load %arg1[%3] : memref<2xi32, #tpu.memory_space<smem>>
    %5 = arith.sitofp %4 : i32 to f32
    %c0 = arith.constant 0 : index
    %c0_1 = arith.constant 0 : index
    %c0_2 = arith.constant 0 : index
    %6 = vector.load %arg5[%c0, %c0_1, %c0_2] : memref<1x128x1xi32, #tpu.memory_space<vmem>>, vector<1x128x1xi32>
    %7 = vector.shape_cast %6 : vector<1x128x1xi32> to vector<128x1xi32>
    %c0_3 = arith.constant 0 : index
    %c0_4 = arith.constant 0 : index
    %c0_5 = arith.constant 0 : index
    %8 = vector.load %arg6[%c0_3, %c0_4, %c0_5] : memref<1x128x1xi32, #tpu.memory_space<vmem>>, vector<1x128x1xi32>
    %9 = vector.shape_cast %8 : vector<1x128x1xi32> to vector<128x1xi32>
    %10 = tpu.iota {dimensions = array<i32: 0>} : vector<128x1xi32>
    %11 = vector.broadcast %4 : i32 to vector<128x1xi32>
    %12 = arith.cmpi slt, %10, %11 : vector<128x1xi32>
    %13 = arith.extui %12 : vector<128x1xi1> to vector<128x1xi32>
    %14 = arith.sitofp %13 : vector<128x1xi32> to vector<128x1xf32>
    %15 = tpu.iota {dimensions = array<i32: 1>} : vector<128x128xi32>
    %16 = vector.broadcast %7 : vector<128x1xi32> to vector<128x128xi32>
    %17 = arith.cmpi eq, %16, %15 : vector<128x128xi32>
    %cst = arith.constant 0.000000e+00 : f32
    %18 = vector.shape_cast %14 : vector<128x1xf32> to vector<128x1xf32>
    %19 = vector.broadcast %18 : vector<128x1xf32> to vector<128x128xf32>
    %20 = vector.broadcast %cst : f32 to vector<128x128xf32>
    %21 = arith.select %17, %19, %20 : vector<128x128xi1>, vector<128x128xf32>
    %22 = tpu.iota {dimensions = array<i32: 1>} : vector<128x128xi32>
    %23 = vector.broadcast %9 : vector<128x1xi32> to vector<128x128xi32>
    %24 = arith.cmpi eq, %23, %22 : vector<128x128xi32>
    %cst_6 = arith.constant 0.000000e+00 : f32
    %25 = vector.shape_cast %14 : vector<128x1xf32> to vector<128x1xf32>
    %26 = vector.broadcast %25 : vector<128x1xf32> to vector<128x128xf32>
    %27 = vector.broadcast %cst_6 : f32 to vector<128x128xf32>
    %28 = arith.select %24, %26, %27 : vector<128x128xi1>, vector<128x128xf32>
    %c0_7 = arith.constant 0 : index
    %c0_8 = arith.constant 0 : index
    %c0_9 = arith.constant 0 : index
    %29 = vector.load %arg3[%c0_7, %c0_8, %c0_9] : memref<1x128x4xf32, #tpu.memory_space<vmem>>, vector<1x128x4xf32>
    %30 = vector.shape_cast %29 : vector<1x128x4xf32> to vector<128x4xf32>
    %cst_10 = arith.constant dense<0.000000e+00> : vector<128x4xf32>
    %31 = tpu.matmul %21, %30, %cst_10 {dimension_numbers = #tpu.dot_dimension_numbers<[1], [0], [0], [1], [0, 0, 1, 1], [], []>} : vector<128x128xf32>, vector<128x4xf32>, vector<128x4xf32> -> vector<128x4xf32>
    %c0_11 = arith.constant 0 : index
    %c0_12 = arith.constant 0 : index
    %c0_13 = arith.constant 0 : index
    %32 = vector.load %arg4[%c0_11, %c0_12, %c0_13] : memref<1x128x4xf32, #tpu.memory_space<vmem>>, vector<1x128x4xf32>
    %33 = vector.shape_cast %32 : vector<1x128x4xf32> to vector<128x4xf32>
    %cst_14 = arith.constant dense<0.000000e+00> : vector<128x4xf32>
    %34 = tpu.matmul %28, %33, %cst_14 {dimension_numbers = #tpu.dot_dimension_numbers<[1], [0], [0], [1], [0, 0, 1, 1], [], []>} : vector<128x128xf32>, vector<128x4xf32>, vector<128x4xf32> -> vector<128x4xf32>
    %c0_15 = arith.constant 0 : index
    %c0_16 = arith.constant 0 : index
    %35 = vector.load %arg8[%c0_15, %c0_16] : memref<128x4xf32, #tpu.memory_space<vmem>>, vector<128x4xf32>
    %36 = arith.subf %31, %34 : vector<128x4xf32>
    %37 = math.absf %36 : vector<128x4xf32>
    %38 = arith.addf %35, %37 : vector<128x4xf32>
    %c0_17 = arith.constant 0 : index
    %c0_18 = arith.constant 0 : index
    %39 = vector.load %arg8[%c0_17, %c0_18] : memref<128x4xf32, #tpu.memory_space<vmem>>, vector<128x4xf32>
    tpu.vector_store %arg8[%c0_17, %c0_18], %38 {strides = array<i32>} : memref<128x4xf32, #tpu.memory_space<vmem>>, vector<128x4xf32>,
    %40 = vector.extract_strided_slice %34 {offsets = [0, 3], sizes = [128, 1], strides = [1, 1]} : vector<128x4xf32> to vector<128x1xf32>
    %41 = vector.broadcast %40 : vector<128x1xf32> to vector<128x128xf32>
    %42 = arith.mulf %21, %41 : vector<128x128xf32>
    %cst_19 = arith.constant dense<0.000000e+00> : vector<128xf32>
    %43 = vector.multi_reduction <add>, %42, %cst_19 [0] : vector<128x128xf32> to vector<128xf32>
    %44 = vector.shape_cast %43 : vector<128xf32> to vector<1x128xf32>
    %c0_20 = arith.constant 0 : index
    %c0_21 = arith.constant 0 : index
    %c0_22 = arith.constant 0 : index
    %45 = vector.load %arg2[%c0_20, %c0_21, %c0_22] : memref<1x1x128xf32, #tpu.memory_space<vmem>>, vector<1x1x128xf32>
    %46 = vector.shape_cast %45 : vector<1x1x128xf32> to vector<1x128xf32>
    %cst_23 = arith.constant 0.000000e+00 : f32
    %47 = vector.broadcast %cst_23 : f32 to vector<1x128xf32>
    %48 = arith.maximumf %46, %47 : vector<1x128xf32>
    %49 = arith.mulf %46, %44 : vector<1x128xf32>
    %50 = arith.subf %48, %49 : vector<1x128xf32>
    %51 = math.absf %46 : vector<1x128xf32>
    %cst_24 = arith.constant 0.000000e+00 : f32
    %52 = vector.broadcast %cst_24 : f32 to vector<1x128xf32>
    %53 = arith.subf %52, %51 : vector<1x128xf32>
    %54 = math.exp %53 : vector<1x128xf32>
    %55 = math.log1p %54 : vector<1x128xf32>
    %56 = arith.addf %50, %55 : vector<1x128xf32>
    %57 = arith.negf %46 : vector<1x128xf32>
    %58 = math.exp %57 : vector<1x128xf32>
    %cst_25 = arith.constant 1.000000e+00 : f32
    %59 = vector.broadcast %cst_25 : f32 to vector<1x128xf32>
    %60 = arith.addf %59, %58 : vector<1x128xf32>
    %61 = arith.divf %59, %60 : vector<1x128xf32>
    %cst_26 = arith.constant 1.000000e+00 : f32
    %62 = vector.broadcast %cst_26 : f32 to vector<1x128xf32>
    %63 = arith.subf %62, %61 : vector<1x128xf32>
    %cst_27 = arith.constant 2.500000e-01 : f32
    %64 = vector.broadcast %cst_27 : f32 to vector<1x128xf32>
    %65 = arith.mulf %64, %44 : vector<1x128xf32>
    %66 = arith.mulf %65, %63 : vector<1x128xf32>
    %67 = arith.mulf %66, %63 : vector<1x128xf32>
    %cst_28 = arith.constant 1.000000e+00 : f32
    %68 = vector.broadcast %cst_28 : f32 to vector<1x128xf32>
    %69 = arith.subf %68, %44 : vector<1x128xf32>
    %cst_29 = arith.constant 7.500000e-01 : f32
    %70 = vector.broadcast %cst_29 : f32 to vector<1x128xf32>
    %71 = arith.mulf %70, %69 : vector<1x128xf32>
    %72 = arith.mulf %71, %61 : vector<1x128xf32>
    %73 = arith.mulf %72, %61 : vector<1x128xf32>
    %74 = arith.addf %67, %73 : vector<1x128xf32>
    %cst_30 = arith.constant 0.000000e+00 : f32
    %75 = vector.broadcast %cst_30 : f32 to vector<1x128xf32>
    %76 = arith.cmpf ogt, %46, %75 : vector<1x128xf32>
    %77 = arith.extui %76 : vector<1x128xi1> to vector<1x128xi32>
    %78 = arith.sitofp %77 : vector<1x128xi32> to vector<1x128xf32>
    %79 = tpu.iota {dimensions = array<i32: 1>} : vector<1x128xi32>
    %c16_i32 = arith.constant 16 : i32
    %80 = vector.broadcast %c16_i32 : i32 to vector<1x128xi32>
    %81 = arith.cmpi slt, %79, %80 : vector<1x128xi32>
    %82 = arith.extui %81 : vector<1x128xi1> to vector<1x128xi32>
    %83 = arith.sitofp %82 : vector<1x128xi32> to vector<1x128xf32>
    %84 = arith.mulf %56, %83 : vector<1x128xf32>
    %85 = arith.mulf %74, %83 : vector<1x128xf32>
    %86 = arith.mulf %78, %83 : vector<1x128xf32>
    %c0_31 = arith.constant 0 : index
    %c0_32 = arith.constant 0 : index
    %87 = vector.load %arg9[%c0_31, %c0_32] : memref<1x128xf32, #tpu.memory_space<vmem>>, vector<1x128xf32>
    %88 = arith.addf %87, %84 : vector<1x128xf32>
    %c0_33 = arith.constant 0 : index
    %c0_34 = arith.constant 0 : index
    %89 = vector.load %arg9[%c0_33, %c0_34] : memref<1x128xf32, #tpu.memory_space<vmem>>, vector<1x128xf32>
    tpu.vector_store %arg9[%c0_33, %c0_34], %88 {strides = array<i32>} : memref<1x128xf32, #tpu.memory_space<vmem>>, vector<1x128xf32>,
    %c0_35 = arith.constant 0 : index
    %c0_36 = arith.constant 0 : index
    %90 = vector.load %arg10[%c0_35, %c0_36] : memref<1x128xf32, #tpu.memory_space<vmem>>, vector<1x128xf32>
    %91 = arith.addf %90, %85 : vector<1x128xf32>
    %c0_37 = arith.constant 0 : index
    %c0_38 = arith.constant 0 : index
    %92 = vector.load %arg10[%c0_37, %c0_38] : memref<1x128xf32, #tpu.memory_space<vmem>>, vector<1x128xf32>
    tpu.vector_store %arg10[%c0_37, %c0_38], %91 {strides = array<i32>} : memref<1x128xf32, #tpu.memory_space<vmem>>, vector<1x128xf32>,
    %c0_39 = arith.constant 0 : index
    %c0_40 = arith.constant 0 : index
    %93 = vector.load %arg11[%c0_39, %c0_40] : memref<1x1xf32, #tpu.memory_space<vmem>>, vector<1x1xf32>
    %94 = vector.shape_cast %86 : vector<1x128xf32> to vector<1x1x128xf32>
    %cst_41 = arith.constant dense<0.000000e+00> : vector<1xf32>
    %95 = vector.multi_reduction <add>, %94, %cst_41 [1, 2] : vector<1x1x128xf32> to vector<1xf32>
    %96 = vector.shape_cast %95 : vector<1xf32> to vector<1x1x1xf32>
    %97 = vector.extract %96[0, 0, 0] : f32 from vector<1x1x1xf32>
    %98 = arith.subf %97, %5 : f32
    %99 = math.absf %98 : f32
    %100 = vector.broadcast %99 : f32 to vector<1x1xf32>
    %101 = arith.addf %93, %100 : vector<1x1xf32>
    %c0_42 = arith.constant 0 : index
    %c0_43 = arith.constant 0 : index
    %102 = vector.load %arg11[%c0_42, %c0_43] : memref<1x1xf32, #tpu.memory_space<vmem>>, vector<1x1xf32>
    tpu.vector_store %arg11[%c0_42, %c0_43], %101 {strides = array<i32>} : memref<1x1xf32, #tpu.memory_space<vmem>>, vector<1x1xf32>,
    %c0_44 = arith.constant 0 : index
    %c0_45 = arith.constant 0 : index
    %103 = vector.load %arg12[%c0_44, %c0_45] : memref<1x1xf32, #tpu.memory_space<vmem>>, vector<1x1xf32>
    %104 = vector.broadcast %5 : f32 to vector<1x1xf32>
    %105 = arith.addf %103, %104 : vector<1x1xf32>
    %c0_46 = arith.constant 0 : index
    %c0_47 = arith.constant 0 : index
    %106 = vector.load %arg12[%c0_46, %c0_47] : memref<1x1xf32, #tpu.memory_space<vmem>>, vector<1x1xf32>
    tpu.vector_store %arg12[%c0_46, %c0_47], %105 {strides = array<i32>} : memref<1x1xf32, #tpu.memory_space<vmem>>, vector<1x1xf32>,
    %c1_i32 = arith.constant 1 : i32
    %107 = arith.cmpi eq, %arg0, %c1_i32 : i32
    %108 = arith.extui %107 : i1 to i32
    %c0_i32_48 = arith.constant 0 : i32
    %109 = arith.cmpi ne, %108, %c0_i32_48 : i32
    scf.if %109 {
      %c0_49 = arith.constant 0 : index
      %c0_50 = arith.constant 0 : index
      %110 = vector.load %arg8[%c0_49, %c0_50] : memref<128x4xf32, #tpu.memory_space<vmem>>, vector<128x4xf32>
      %c0_51 = arith.constant 0 : index
      %c0_52 = arith.constant 0 : index
      %111 = vector.load %arg12[%c0_51, %c0_52] : memref<1x1xf32, #tpu.memory_space<vmem>>, vector<1x1xf32>
      %112 = vector.shape_cast %111 : vector<1x1xf32> to vector<1x1x1xf32>
      %cst_53 = arith.constant dense<0.000000e+00> : vector<1xf32>
      %113 = vector.multi_reduction <add>, %112, %cst_53 [1, 2] : vector<1x1x1xf32> to vector<1xf32>
      %114 = vector.shape_cast %113 : vector<1xf32> to vector<1x1x1xf32>
      %115 = vector.extract %114[0, 0, 0] : f32 from vector<1x1x1xf32>
      %cst_54 = arith.constant 1.000000e+00 : f32
      %116 = arith.maximumf %115, %cst_54 : f32
      %cst_55 = arith.constant 1.000000e+00 : f32
      %117 = arith.divf %cst_55, %116 : f32
      %118 = vector.extract_strided_slice %110 {offsets = [0, 0], sizes = [128, 1], strides = [1, 1]} : vector<128x4xf32> to vector<128x1xf32>
      %119 = vector.shape_cast %118 : vector<128x1xf32> to vector<1x128x1xf32>
      %cst_56 = arith.constant dense<0.000000e+00> : vector<1xf32>
      %120 = vector.multi_reduction <add>, %119, %cst_56 [1, 2] : vector<1x128x1xf32> to vector<1xf32>
      %121 = vector.shape_cast %120 : vector<1xf32> to vector<1x1x1xf32>
      %122 = vector.extract %121[0, 0, 0] : f32 from vector<1x1x1xf32>
      %123 = arith.mulf %122, %117 : f32
      %124 = vector.extract_strided_slice %110 {offsets = [0, 1], sizes = [128, 1], strides = [1, 1]} : vector<128x4xf32> to vector<128x1xf32>
      %125 = vector.shape_cast %124 : vector<128x1xf32> to vector<1x128x1xf32>
      %cst_57 = arith.constant dense<0.000000e+00> : vector<1xf32>
      %126 = vector.multi_reduction <add>, %125, %cst_57 [1, 2] : vector<1x128x1xf32> to vector<1xf32>
      %127 = vector.shape_cast %126 : vector<1xf32> to vector<1x1x1xf32>
      %128 = vector.extract %127[0, 0, 0] : f32 from vector<1x1x1xf32>
      %129 = arith.mulf %128, %117 : f32
      %130 = vector.extract_strided_slice %110 {offsets = [0, 2], sizes = [128, 1], strides = [1, 1]} : vector<128x4xf32> to vector<128x1xf32>
      %131 = vector.shape_cast %130 : vector<128x1xf32> to vector<1x128x1xf32>
      %cst_58 = arith.constant dense<0.000000e+00> : vector<1xf32>
      %132 = vector.multi_reduction <add>, %131, %cst_58 [1, 2] : vector<1x128x1xf32> to vector<1xf32>
      %133 = vector.shape_cast %132 : vector<1xf32> to vector<1x1x1xf32>
      %134 = vector.extract %133[0, 0, 0] : f32 from vector<1x1x1xf32>
      %135 = arith.mulf %134, %117 : f32
      %c0_59 = arith.constant 0 : index
      %c0_60 = arith.constant 0 : index
      %136 = vector.load %arg9[%c0_59, %c0_60] : memref<1x128xf32, #tpu.memory_space<vmem>>, vector<1x128xf32>
      %137 = vector.shape_cast %136 : vector<1x128xf32> to vector<1x1x128xf32>
      %cst_61 = arith.constant dense<0.000000e+00> : vector<1xf32>
      %138 = vector.multi_reduction <add>, %137, %cst_61 [1, 2] : vector<1x1x128xf32> to vector<1xf32>
      %139 = vector.shape_cast %138 : vector<1xf32> to vector<1x1x1xf32>
      %140 = vector.extract %139[0, 0, 0] : f32 from vector<1x1x1xf32>
      %cst_62 = arith.constant 3.125000e-02 : f32
      %141 = arith.mulf %140, %cst_62 : f32
      %c0_63 = arith.constant 0 : index
      %c0_64 = arith.constant 0 : index
      %142 = vector.load %arg10[%c0_63, %c0_64] : memref<1x128xf32, #tpu.memory_space<vmem>>, vector<1x128xf32>
      %143 = vector.shape_cast %142 : vector<1x128xf32> to vector<1x1x128xf32>
      %cst_65 = arith.constant dense<0.000000e+00> : vector<1xf32>
      %144 = vector.multi_reduction <add>, %143, %cst_65 [1, 2] : vector<1x1x128xf32> to vector<1xf32>
      %145 = vector.shape_cast %144 : vector<1xf32> to vector<1x1x1xf32>
      %146 = vector.extract %145[0, 0, 0] : f32 from vector<1x1x1xf32>
      %cst_66 = arith.constant 3.125000e-02 : f32
      %147 = arith.mulf %146, %cst_66 : f32
      %148 = arith.mulf %147, %141 : f32
      %c0_67 = arith.constant 0 : index
      %c0_68 = arith.constant 0 : index
      %149 = vector.load %arg11[%c0_67, %c0_68] : memref<1x1xf32, #tpu.memory_space<vmem>>, vector<1x1xf32>
      %150 = vector.shape_cast %149 : vector<1x1xf32> to vector<1x1x1xf32>
      %cst_69 = arith.constant dense<0.000000e+00> : vector<1xf32>
      %151 = vector.multi_reduction <add>, %150, %cst_69 [1, 2] : vector<1x1x1xf32> to vector<1xf32>
      %152 = vector.shape_cast %151 : vector<1xf32> to vector<1x1x1xf32>
      %153 = vector.extract %152[0, 0, 0] : f32 from vector<1x1x1xf32>
      %cst_70 = arith.constant 5.000000e-01 : f32
      %154 = arith.mulf %153, %cst_70 : f32
      %c0_71 = arith.constant 0 : index
      %155 = memref.load %arg7[%c0_71] : memref<6xf32, #tpu.memory_space<smem>>
      memref.store %135, %arg7[%c0_71] : memref<6xf32, #tpu.memory_space<smem>>
      %c1 = arith.constant 1 : index
      %156 = memref.load %arg7[%c1] : memref<6xf32, #tpu.memory_space<smem>>
      memref.store %148, %arg7[%c1] : memref<6xf32, #tpu.memory_space<smem>>
      %c2 = arith.constant 2 : index
      %157 = memref.load %arg7[%c2] : memref<6xf32, #tpu.memory_space<smem>>
      memref.store %154, %arg7[%c2] : memref<6xf32, #tpu.memory_space<smem>>
      %c3 = arith.constant 3 : index
      %158 = memref.load %arg7[%c3] : memref<6xf32, #tpu.memory_space<smem>>
      memref.store %135, %arg7[%c3] : memref<6xf32, #tpu.memory_space<smem>>
      %c4 = arith.constant 4 : index
      %159 = memref.load %arg7[%c4] : memref<6xf32, #tpu.memory_space<smem>>
      memref.store %123, %arg7[%c4] : memref<6xf32, #tpu.memory_space<smem>>
      %c5 = arith.constant 5 : index
      %160 = memref.load %arg7[%c5] : memref<6xf32, #tpu.memory_space<smem>>
      memref.store %129, %arg7[%c5] : memref<6xf32, #tpu.memory_space<smem>>
    } else {
    }
    return
  }
  func.func @transform_0(%arg0: i32, %arg1: memref<2xi32, #tpu.memory_space<smem>>) -> (i32, i32, i32) {
    %c0_i32 = arith.constant 0 : i32
    %c0_i32_0 = arith.constant 0 : i32
    %c0_i32_1 = arith.constant 0 : i32
    return %arg0, %c0_i32, %c0_i32_0 : i32, i32, i32
  }
  func.func @transform_1(%arg0: i32, %arg1: memref<2xi32, #tpu.memory_space<smem>>) -> (i32, i32, i32) {
    %c0_i32 = arith.constant 0 : i32
    %c0_i32_0 = arith.constant 0 : i32
    %c0_i32_1 = arith.constant 0 : i32
    return %arg0, %c0_i32, %c0_i32_0 : i32, i32, i32
  }
  func.func @transform_2(%arg0: i32, %arg1: memref<2xi32, #tpu.memory_space<smem>>) -> (i32, i32, i32) {
    %c0_i32 = arith.constant 0 : i32
    %c0_i32_0 = arith.constant 0 : i32
    %c0_i32_1 = arith.constant 0 : i32
    return %arg0, %c0_i32, %c0_i32_0 : i32, i32, i32
  }
  func.func @transform_3(%arg0: i32, %arg1: memref<2xi32, #tpu.memory_space<smem>>) -> (i32, i32, i32) {
    %c0_i32 = arith.constant 0 : i32
    %c0_i32_0 = arith.constant 0 : i32
    %c0_i32_1 = arith.constant 0 : i32
    return %arg0, %c0_i32, %c0_i32_0 : i32, i32, i32
  }
  func.func @transform_4(%arg0: i32, %arg1: memref<2xi32, #tpu.memory_space<smem>>) -> (i32, i32, i32) {
    %c0_i32 = arith.constant 0 : i32
    %c0_i32_0 = arith.constant 0 : i32
    %c0_i32_1 = arith.constant 0 : i32
    return %arg0, %c0_i32, %c0_i32_0 : i32, i32, i32
  }
  func.func @transform_5(%arg0: i32, %arg1: memref<2xi32, #tpu.memory_space<smem>>) -> i32 {
    %c0_i32 = arith.constant 0 : i32
    %c0_i32_0 = arith.constant 0 : i32
    return %c0_i32 : i32
  }
}

</mosaic_0001>

<llo_original>
// kernel: tpu_custom_call.1
$region0: #{tpu_custom_call.1}
  #allocation0 [shape = 'u32[]', space=smem, size = 0x4, offset = 0x4, fixed_abs, tag = 'smem constant byte address 0x4 - core index']
  #allocation1 [shape = 'u32[144,128]{1,0:T(1,128)}', space=vmem, size = 0x12000, scoped, tag = 'internal scratch']
  #allocation2 [shape = 'f32[128,4]{1,0:T(8,128)}', space=vmem, size = 0x10000, scoped, tag = 'scratch operand']
  #allocation3 [shape = 'f32[1,128]{1,0:T(1,128)}', space=vmem, size = 0x200, scoped, tag = 'scratch operand']
  #allocation4 [shape = 'f32[1,128]{1,0:T(1,128)}', space=vmem, size = 0x200, scoped, tag = 'scratch operand']
  #allocation5 [shape = 'f32[1,1]{1,0:T(1,128)}', space=vmem, size = 0x200, scoped, tag = 'scratch operand']
  #allocation6 [shape = 'f32[1,1]{1,0:T(1,128)}', space=vmem, size = 0x200, scoped, tag = 'scratch operand']
  #allocation7 [shape = 's32[1]{0}', space=sflag, size = 0x4, scoped, tag = 'scoped memory for tpu_custom_call.1']
  #allocation8 [shape = 'u8[512]{0}', space=smem, size = 0x200, scoped, tag = 'prefetched SMEM operand 0']
  %s0 = inlined_call_operand.vmem [shape: s32[2], index: 0, kind: input, shape index: {}]
  %s1 = inlined_call_operand.vmem [shape: f32[2,1,128], index: 1, kind: input, shape index: {}]
  %s2 = inlined_call_operand.vmem [shape: f32[2,128,4], index: 2, kind: input, shape index: {}]
  %s3 = inlined_call_operand.vmem [shape: f32[2,128,4], index: 3, kind: input, shape index: {}]
  %s4 = inlined_call_operand.vmem [shape: s32[2,128,1], index: 4, kind: input, shape index: {}]
  %s5 = inlined_call_operand.vmem [shape: s32[2,128,1], index: 5, kind: input, shape index: {}]
  %s6 = inlined_call_operand.hbm [shape: f32[6], index: 6, kind: output, shape index: {}]
  %s7 = sld [smem:[#allocation0]]
  $region61: #{tpu_custom_call.1} parent=0
    _
  %s9 = ssub.s32 1, %s7
  %s10 = scalar_select 0, %s9, %s7
  %s11 = sshll.u32 %s0, 4
  %s12 = int_to_ptr.vmem [resolvable:$true] %s11
  %14 = dma.vmem_to_smem %s12, 16, [#allocation8], [#allocation7]
  %15 = dma.done [#allocation7], 16
  %16 = sfence
  $region1: #{tpu_custom_call.1} parent=0
    #allocation9 [shape = 'u8[512]{0}', space=smem, size = 0x200, scoped, tag = 'output window, operand 0, single buffered']
    #allocation10 [shape = 's32[2]{0}', space=sflag, size = 0x8, scoped, tag = 'scoped memory for tpu_custom_call.1']
    %17 = vsyncpa [#allocation10], 0
    loop: start=0, step=1, limit=4
    $region2: #{tpu_custom_call.1} parent=1 // loop_pre_header
      _
    $region3: #{tpu_custom_call.1} parent=1 // loop_header
      %s19 = sphi 0, %s23
      %p20 = scmp.ge.s32.totalorder %s19, 4
      %s29 = sphi 0, %s31
      %s32 = sphi 0, %s29
      %s33 = sphi 0, %s32
      %s49 = sphi 0, %s33
      %s55 = sphi 0, %s57
      %s58 = sphi 0, %s55
      %s59 = sphi 0, %s58
      %s75 = sphi 0, %s59
      %s81 = sphi 0, %s83
      %s84 = sphi 0, %s81
      %s85 = sphi 0, %s84
      %s101 = sphi 0, %s85
      %s107 = sphi 0, %s109
      %s110 = sphi 0, %s107
      %s111 = sphi 0, %s110
      %s127 = sphi 0, %s111
      %s133 = sphi 0, %s135
      %s136 = sphi 0, %s133
      %s137 = sphi 0, %s136
      %s153 = sphi 0, %s137
      %s157 = sphi 0, %s157
      %s159 = sphi 0, %s157
      %s160 = sphi 0, %s159
      %s174 = sphi 0, %s160
    $region4: #{tpu_custom_call.1} parent=1 // loop_header_branch
      %22 = sbr.rel (%p20) target = $region8
    $region5: #{tpu_custom_call.1} parent=1 // loop_body
      %s24 = ssub.s32 %s19, 1
      %s25 = ssub.s32 %s19, 2
      %s26 = sadd.s32 %s19, 1
      %s27 = ssub.s32 %s19, %s26
      %p28 = scmp.eq.s32.totalorder %s27, 0
      %s30 = sadd.s32 %s29, 1
      %s31 = scalar_select %p28, %s29, %s30
      %p34 = pneg %p28
      %p35 = scmp.eq.s32.totalorder %s19, 1
      %p36 = por %p34, %p35
      %p37 = scmp.ne.s32.totalorder %s29, %s32
      %p38 = scmp.eq.s32.totalorder %s19, 0
      %p39 = por %p37, %p38
      %p40 = scmp.ne.s32.totalorder %s29, %s32
      %p41 = scmp.eq.s32.totalorder %s24, 1
      %p42 = por %p40, %p41
      %p43 = scmp.ne.s32.totalorder %s32, %s33
      %p44 = scmp.eq.s32.totalorder %s24, 0
      %p45 = por %p43, %p44
      %p46 = scmp.ne.s32.totalorder %s32, %s33
      %p47 = scmp.eq.s32.totalorder %s25, 1
      %p48 = por %p46, %p47
      %p50 = scmp.ne.s32.totalorder %s33, %s49
      %p51 = scmp.eq.s32.totalorder %s25, 0
      %p52 = por %p50, %p51
      %s53 = ssub.s32 %s19, %s26
      %p54 = scmp.eq.s32.totalorder %s53, 0
      %s56 = sadd.s32 %s55, 1
      %s57 = scalar_select %p54, %s55, %s56
      %p60 = pneg %p54
      %p61 = scmp.eq.s32.totalorder %s19, 1
      %p62 = por %p60, %p61
      %p63 = scmp.ne.s32.totalorder %s55, %s58
      %p64 = scmp.eq.s32.totalorder %s19, 0
      %p65 = por %p63, %p64
      %p66 = scmp.ne.s32.totalorder %s55, %s58
      %p67 = scmp.eq.s32.totalorder %s24, 1
      %p68 = por %p66, %p67
      %p69 = scmp.ne.s32.totalorder %s58, %s59
      %p70 = scmp.eq.s32.totalorder %s24, 0
      %p71 = por %p69, %p70
      %p72 = scmp.ne.s32.totalorder %s58, %s59
      %p73 = scmp.eq.s32.totalorder %s25, 1
      %p74 = por %p72, %p73
      %p76 = scmp.ne.s32.totalorder %s59, %s75
      %p77 = scmp.eq.s32.totalorder %s25, 0
      %p78 = por %p76, %p77
      %s79 = ssub.s32 %s19, %s26
      %p80 = scmp.eq.s32.totalorder %s79, 0
      %s82 = sadd.s32 %s81, 1
      %s83 = scalar_select %p80, %s81, %s82
      %p86 = pneg %p80
      %p87 = scmp.eq.s32.totalorder %s19, 1
      %p88 = por %p86, %p87
      %p89 = scmp.ne.s32.totalorder %s81, %s84
      %p90 = scmp.eq.s32.totalorder %s19, 0
      %p91 = por %p89, %p90
      %p92 = scmp.ne.s32.totalorder %s81, %s84
      %p93 = scmp.eq.s32.totalorder %s24, 1
      %p94 = por %p92, %p93
      %p95 = scmp.ne.s32.totalorder %s84, %s85
      %p96 = scmp.eq.s32.totalorder %s24, 0
      %p97 = por %p95, %p96
      %p98 = scmp.ne.s32.totalorder %s84, %s85
      %p99 = scmp.eq.s32.totalorder %s25, 1
      %p100 = por %p98, %p99
      %p102 = scmp.ne.s32.totalorder %s85, %s101
      %p103 = scmp.eq.s32.totalorder %s25, 0
      %p104 = por %p102, %p103
      %s105 = ssub.s32 %s19, %s26
      %p106 = scmp.eq.s32.totalorder %s105, 0
      %s108 = sadd.s32 %s107, 1
      %s109 = scalar_select %p106, %s107, %s108
      %p112 = pneg %p106
      %p113 = scmp.eq.s32.totalorder %s19, 1
      %p114 = por %p112, %p113
      %p115 = scmp.ne.s32.totalorder %s107, %s110
      %p116 = scmp.eq.s32.totalorder %s19, 0
      %p117 = por %p115, %p116
      %p118 = scmp.ne.s32.totalorder %s107, %s110
      %p119 = scmp.eq.s32.totalorder %s24, 1
      %p120 = por %p118, %p119
      %p121 = scmp.ne.s32.totalorder %s110, %s111
      %p122 = scmp.eq.s32.totalorder %s24, 0
      %p123 = por %p121, %p122
      %p124 = scmp.ne.s32.totalorder %s110, %s111
      %p125 = scmp.eq.s32.totalorder %s25, 1
      %p126 = por %p124, %p125
      %p128 = scmp.ne.s32.totalorder %s111, %s127
      %p129 = scmp.eq.s32.totalorder %s25, 0
      %p130 = por %p128, %p129
      %s131 = ssub.s32 %s19, %s26
      %p132 = scmp.eq.s32.totalorder %s131, 0
      %s134 = sadd.s32 %s133, 1
      %s135 = scalar_select %p132, %s133, %s134
      %p138 = pneg %p132
      %p139 = scmp.eq.s32.totalorder %s19, 1
      %p140 = por %p138, %p139
      %p141 = scmp.ne.s32.totalorder %s133, %s136
      %p142 = scmp.eq.s32.totalorder %s19, 0
      %p143 = por %p141, %p142
      %p144 = scmp.ne.s32.totalorder %s133, %s136
      %p145 = scmp.eq.s32.totalorder %s24, 1
      %p146 = por %p144, %p145
      %p147 = scmp.ne.s32.totalorder %s136, %s137
      %p148 = scmp.eq.s32.totalorder %s24, 0
      %p149 = por %p147, %p148
      %p150 = scmp.ne.s32.totalorder %s136, %s137
      %p151 = scmp.eq.s32.totalorder %s25, 1
      %p152 = por %p150, %p151
      %p154 = scmp.ne.s32.totalorder %s137, %s153
      %p155 = scmp.eq.s32.totalorder %s25, 0
      %p156 = por %p154, %p155
      %s158 = sadd.s32 %s157, 1
      %p161 = scmp.eq.s32.totalorder %s19, 1
      %p162 = scmp.ne.s32.totalorder %s157, %s159
      %p163 = scmp.eq.s32.totalorder %s19, 0
      %p164 = por %p162, %p163
      %p165 = scmp.ne.s32.totalorder %s157, %s159
      %p166 = scmp.eq.s32.totalorder %s24, 1
      %p167 = por %p165, %p166
      %p168 = scmp.ne.s32.totalorder %s159, %s160
      %p169 = scmp.eq.s32.totalorder %s24, 0
      %p170 = por %p168, %p169
      %p171 = scmp.ne.s32.totalorder %s159, %s160
      %p172 = scmp.eq.s32.totalorder %s25, 1
      %p173 = por %p171, %p172
      %p175 = scmp.ne.s32.totalorder %s160, %s174
      %p176 = scmp.eq.s32.totalorder %s25, 0
      %p177 = por %p175, %p176
      %p178 = scmp.le.s32.totalorder 1, %s19
      %p179 = scmp.lt.s32.totalorder %s19, 3
      %p180 = pnand %p178, %p179
      %p181 = pneg %p180
      // Predicated region
      $region9: #{tpu_custom_call.1} parent=5 // pred_check
        _
      $region10: #{tpu_custom_call.1} parent=5 // pred_check_branch
        %183 = sbr.rel (%p180) target = $region12
      $region11: #{tpu_custom_call.1} parent=5 // pred_region
        %s184 = ssub.s32 %s19, 1
      $region12: #{tpu_custom_call.1} parent=5 // pred_fallthru
        _
      %p185 = scmp.lt.s32.totalorder %s19, 2
      // Predicated region
      $region13: #{tpu_custom_call.1} parent=5 // pred_check
        %p186 = pneg %p185
      $region14: #{tpu_custom_call.1} parent=5 // pred_check_branch
        %188 = sbr.rel (%p186) target = $region16
      $region15: #{tpu_custom_call.1} parent=5 // pred_region
        // Predicated region
        $region17: #{tpu_custom_call.1} parent=15 // pred_check
          %p189 = pneg %p39
        $region18: #{tpu_custom_call.1} parent=15 // pred_check_branch
          %191 = sbr.rel (%p189) target = $region20
        $region19: #{tpu_custom_call.1} parent=15 // pred_region
          %p192 = scmp.lt.s32.totalorder %s19, 1
          %s193 = scalar_select %p192, %s19, 1
          %s194 = scalar_lea.vmem %s1, %s193
        $region20: #{tpu_custom_call.1} parent=15 // pred_fallthru
          _
        // Predicated region
        $region21: #{tpu_custom_call.1} parent=15 // pred_check
          %p195 = pneg %p65
        $region22: #{tpu_custom_call.1} parent=15 // pred_check_branch
          %197 = sbr.rel (%p195) target = $region24
        $region23: #{tpu_custom_call.1} parent=15 // pred_region
          %p198 = scmp.lt.s32.totalorder %s19, 1
          %s199 = scalar_select %p198, %s19, 1
          %s200 = smul.addr %s199, 16
          %s201 = smul.addr %s200, 8
          %s202 = scalar_lea.vmem %s2, %s201
        $region24: #{tpu_custom_call.1} parent=15 // pred_fallthru
          _
        // Predicated region
        $region25: #{tpu_custom_call.1} parent=15 // pred_check
          %p203 = pneg %p91
        $region26: #{tpu_custom_call.1} parent=15 // pred_check_branch
          %205 = sbr.rel (%p203) target = $region28
        $region27: #{tpu_custom_call.1} parent=15 // pred_region
          %p206 = scmp.lt.s32.totalorder %s19, 1
          %s207 = scalar_select %p206, %s19, 1
          %s208 = smul.addr %s207, 16
          %s209 = smul.addr %s208, 8
          %s210 = scalar_lea.vmem %s3, %s209
        $region28: #{tpu_custom_call.1} parent=15 // pred_fallthru
          _
        // Predicated region
        $region29: #{tpu_custom_call.1} parent=15 // pred_check
          %p211 = pneg %p117
        $region30: #{tpu_custom_call.1} parent=15 // pred_check_branch
          %213 = sbr.rel (%p211) target = $region32
        $region31: #{tpu_custom_call.1} parent=15 // pred_region
          %p214 = scmp.lt.s32.totalorder %s19, 1
          %s215 = scalar_select %p214, %s19, 1
          %s216 = smul.addr %s215, 16
          %s217 = smul.addr %s216, 8
          %s218 = scalar_lea.vmem %s4, %s217
        $region32: #{tpu_custom_call.1} parent=15 // pred_fallthru
          _
        // Predicated region
        $region33: #{tpu_custom_call.1} parent=15 // pred_check
          %p219 = pneg %p143
        $region34: #{tpu_custom_call.1} parent=15 // pred_check_branch
          %221 = sbr.rel (%p219) target = $region36
        $region35: #{tpu_custom_call.1} parent=15 // pred_region
          %p222 = scmp.lt.s32.totalorder %s19, 1
          %s223 = scalar_select %p222, %s19, 1
          %s224 = smul.addr %s223, 16
          %s225 = smul.addr %s224, 8
          %s226 = scalar_lea.vmem %s5, %s225
        $region36: #{tpu_custom_call.1} parent=15 // pred_fallthru
          _
      $region16: #{tpu_custom_call.1} parent=5 // pred_fallthru
        _
      %p227 = scmp.le.s32.totalorder 1, %s19
      %p228 = scmp.lt.s32.totalorder %s19, 3
      %p229 = pnand %p227, %p228
      %p230 = pneg %p229
      // Predicated region
      $region37: #{tpu_custom_call.1} parent=5 // pred_check
        _
      $region38: #{tpu_custom_call.1} parent=5 // pred_check_branch
        %232 = sbr.rel (%p229) target = $region40
      $region39: #{tpu_custom_call.1} parent=5 // pred_region
        %s233 = ssub.s32 %s19, 1
        %p234 = scmp.lt.s32.totalorder %s24, 1
        %s235 = scalar_select %p234, %s24, 1
        %s236 = scalar_lea.vmem %s1, %s235
        %p237 = pneg %p45
        %p238 = pneg %p42
        %p239 = scmp.lt.s32.totalorder %s24, 1
        %s240 = scalar_select %p239, %s24, 1
        %s241 = smul.addr %s240, 16
        %s242 = smul.addr %s241, 8
        %s243 = scalar_lea.vmem %s2, %s242
        %p244 = pneg %p71
        %p245 = pneg %p68
        %p246 = scmp.lt.s32.totalorder %s24, 1
        %s247 = scalar_select %p246, %s24, 1
        %s248 = smul.addr %s247, 16
        %s249 = smul.addr %s248, 8
        %s250 = scalar_lea.vmem %s3, %s249
        %p251 = pneg %p97
        %p252 = pneg %p94
        %p253 = scmp.lt.s32.totalorder %s24, 1
        %s254 = scalar_select %p253, %s24, 1
        %s255 = smul.addr %s254, 16
        %s256 = smul.addr %s255, 8
        %s257 = scalar_lea.vmem %s4, %s256
        %p258 = pneg %p123
        %p259 = pneg %p120
        %p260 = scmp.lt.s32.totalorder %s24, 1
        %s261 = scalar_select %p260, %s24, 1
        %s262 = smul.addr %s261, 16
        %s263 = smul.addr %s262, 8
        %s264 = scalar_lea.vmem %s5, %s263
        %p265 = pneg %p149
        %p266 = pneg %p146
        %p267 = pneg %p170
        %p268 = pneg %p167
        %p269 = scmp.lt.s32.totalorder %s24, 1
        %s270 = scalar_select %p269, %s24, 1
        %s271 = scalar_lea.vmem %s1, %s270
        %p272 = scmp.lt.s32.totalorder %s24, 1
        %s273 = scalar_select %p272, %s24, 1
        %s274 = smul.addr %s273, 16
        %s275 = smul.addr %s274, 8
        %s276 = scalar_lea.vmem %s2, %s275
        %p277 = scmp.lt.s32.totalorder %s24, 1
        %s278 = scalar_select %p277, %s24, 1
        %s279 = smul.addr %s278, 16
        %s280 = smul.addr %s279, 8
        %s281 = scalar_lea.vmem %s3, %s280
        %p282 = scmp.lt.s32.totalorder %s24, 1
        %s283 = scalar_select %p282, %s24, 1
        %s284 = smul.addr %s283, 16
        %s285 = smul.addr %s284, 8
        %s286 = scalar_lea.vmem %s4, %s285
        %p287 = scmp.lt.s32.totalorder %s24, 1
        %s288 = scalar_select %p287, %s24, 1
        %s289 = smul.addr %s288, 16
        %s290 = smul.addr %s289, 8
        %s291 = scalar_lea.vmem %s5, %s290
        %p292 = scmp.eq.s32.totalorder %s24, 0
        // Predicated region
        $region41: #{tpu_custom_call.1} parent=39 // pred_check
          %p293 = pneg %p292
        $region42: #{tpu_custom_call.1} parent=39 // pred_check_branch
          %295 = sbr.rel (%p293) target = $region44
        $region43: #{tpu_custom_call.1} parent=39 // pred_region
          %vm296 = vcmask 31744
          %297 = vst.msk [vmem:[#allocation2] sm:$0xff] %vm296, 0.0
          %298 = vst.msk [vmem:[#allocation2 + $0x8] sm:$0xff] %vm296, 0.0
          %299 = vst.msk [vmem:[#allocation2 + $0x10] sm:$0xff] %vm296, 0.0
          %300 = vst.msk [vmem:[#allocation2 + $0x18] sm:$0xff] %vm296, 0.0
          %301 = vst.msk [vmem:[#allocation2 + $0x20] sm:$0xff] %vm296, 0.0
          %302 = vst.msk [vmem:[#allocation2 + $0x28] sm:$0xff] %vm296, 0.0
          %303 = vst.msk [vmem:[#allocation2 + $0x30] sm:$0xff] %vm296, 0.0
          %304 = vst.msk [vmem:[#allocation2 + $0x38] sm:$0xff] %vm296, 0.0
          %305 = vst.msk [vmem:[#allocation2 + $0x40] sm:$0xff] %vm296, 0.0
          %306 = vst.msk [vmem:[#allocation2 + $0x48] sm:$0xff] %vm296, 0.0
          %307 = vst.msk [vmem:[#allocation2 + $0x50] sm:$0xff] %vm296, 0.0
          %308 = vst.msk [vmem:[#allocation2 + $0x58] sm:$0xff] %vm296, 0.0
          %309 = vst.msk [vmem:[#allocation2 + $0x60] sm:$0xff] %vm296, 0.0
          %310 = vst.msk [vmem:[#allocation2 + $0x68] sm:$0xff] %vm296, 0.0
          %311 = vst.msk [vmem:[#allocation2 + $0x70] sm:$0xff] %vm296, 0.0
          %312 = vst.msk [vmem:[#allocation2 + $0x78] sm:$0xff] %vm296, 0.0
          %313 = vst [vmem:[#allocation3] sm:$0x1] 0.0
          %314 = vst [vmem:[#allocation4] sm:$0x1] 0.0
          %vm315 = vcmask 0
          %316 = vst.msk [vmem:[#allocation5] sm:$0x1] %vm315, 0.0
          %317 = vst.msk [vmem:[#allocation6] sm:$0x1] %vm315, 0.0
        $region44: #{tpu_custom_call.1} parent=39 // pred_fallthru
          _
        %s318 = sld [smem:[#allocation8 + %s24]]
        %s319 = scvt.s32.f32 %s318
        %v320 = vld [vmem:[%s286] sm:$0xff]
        %v321 = vld [vmem:[%s286 + $0x8] sm:$0xff]
        %v322 = vld [vmem:[%s286 + $0x10] sm:$0xff]
        %v323 = vld [vmem:[%s286 + $0x18] sm:$0xff]
        %v324 = vld [vmem:[%s286 + $0x20] sm:$0xff]
        %v325 = vld [vmem:[%s286 + $0x28] sm:$0xff]
        %v326 = vld [vmem:[%s286 + $0x30] sm:$0xff]
        %v327 = vld [vmem:[%s286 + $0x38] sm:$0xff]
        %v328 = vld [vmem:[%s286 + $0x40] sm:$0xff]
        %v329 = vld [vmem:[%s286 + $0x48] sm:$0xff]
        %v330 = vld [vmem:[%s286 + $0x50] sm:$0xff]
        %v331 = vld [vmem:[%s286 + $0x58] sm:$0xff]
        %v332 = vld [vmem:[%s286 + $0x60] sm:$0xff]
        %v333 = vld [vmem:[%s286 + $0x68] sm:$0xff]
        %v334 = vld [vmem:[%s286 + $0x70] sm:$0xff]
        %v335 = vld [vmem:[%s286 + $0x78] sm:$0xff]
        %v336 = vld [vmem:[%s291] sm:$0xff]
        %v337 = vld [vmem:[%s291 + $0x8] sm:$0xff]
        %v338 = vld [vmem:[%s291 + $0x10] sm:$0xff]
        %v339 = vld [vmem:[%s291 + $0x18] sm:$0xff]
        %v340 = vld [vmem:[%s291 + $0x20] sm:$0xff]
        %v341 = vld [vmem:[%s291 + $0x28] sm:$0xff]
        %v342 = vld [vmem:[%s291 + $0x30] sm:$0xff]
        %v343 = vld [vmem:[%s291 + $0x38] sm:$0xff]
        %v344 = vld [vmem:[%s291 + $0x40] sm:$0xff]
        %v345 = vld [vmem:[%s291 + $0x48] sm:$0xff]
        %v346 = vld [vmem:[%s291 + $0x50] sm:$0xff]
        %v347 = vld [vmem:[%s291 + $0x58] sm:$0xff]
        %v348 = vld [vmem:[%s291 + $0x60] sm:$0xff]
        %v349 = vld [vmem:[%s291 + $0x68] sm:$0xff]
        %v350 = vld [vmem:[%s291 + $0x70] sm:$0xff]
        %v351 = vld [vmem:[%s291 + $0x78] sm:$0xff]
        %v352 = vlaneseq
        %v353 = vshrl.u32 %v352, 7
        %v354 = vadd.s32 %v353, 8
        %v355 = vadd.s32 %v353, 16
        %v356 = vadd.s32 %v353, 24
        %v357 = vadd.s32 %v353, 32
        %v358 = vadd.s32 %v353, 40
        %v359 = vadd.s32 %v353, 48
        %v360 = vadd.s32 %v353, 56
        %v361 = vadd.s32 %v353, 64
        %v362 = vadd.s32 %v353, 72
        %v363 = vadd.s32 %v353, 80
        %v364 = vadd.s32 %v353, 88
        %v365 = vadd.s32 %v353, 96
        %v366 = vadd.s32 %v353, 104
        %v367 = vadd.s32 %v353, 112
        %v368 = vadd.s32 %v353, 120
        %v369 = vstv %s318
        %vm370 = vcmp.lt.s32.totalorder %v353, %v369
        %vm371 = vcmp.lt.s32.totalorder %v354, %v369
        %vm372 = vcmp.lt.s32.totalorder %v355, %v369
        %vm373 = vcmp.lt.s32.totalorder %v356, %v369
        %vm374 = vcmp.lt.s32.totalorder %v357, %v369
        %vm375 = vcmp.lt.s32.totalorder %v358, %v369
        %vm376 = vcmp.lt.s32.totalorder %v359, %v369
        %vm377 = vcmp.lt.s32.totalorder %v360, %v369
        %vm378 = vcmp.lt.s32.totalorder %v361, %v369
        %vm379 = vcmp.lt.s32.totalorder %v362, %v369
        %vm380 = vcmp.lt.s32.totalorder %v363, %v369
        %vm381 = vcmp.lt.s32.totalorder %v364, %v369
        %vm382 = vcmp.lt.s32.totalorder %v365, %v369
        %vm383 = vcmp.lt.s32.totalorder %v366, %v369
        %vm384 = vcmp.lt.s32.totalorder %v367, %v369
        %vm385 = vcmp.lt.s32.totalorder %v368, %v369
        %v386 = vsel %vm370, 1, 0
        %v387 = vsel %vm371, 1, 0
        %v388 = vsel %vm372, 1, 0
        %v389 = vsel %vm373, 1, 0
        %v390 = vsel %vm374, 1, 0
        %v391 = vsel %vm375, 1, 0
        %v392 = vsel %vm376, 1, 0
        %v393 = vsel %vm377, 1, 0
        %v394 = vsel %vm378, 1, 0
        %v395 = vsel %vm379, 1, 0
        %v396 = vsel %vm380, 1, 0
        %v397 = vsel %vm381, 1, 0
        %v398 = vsel %vm382, 1, 0
        %v399 = vsel %vm383, 1, 0
        %v400 = vsel %vm384, 1, 0
        %v401 = vsel %vm385, 1, 0
        %v402 = vcvt.s32.f32 %v386
        %v403 = vcvt.s32.f32 %v387
        %v404 = vcvt.s32.f32 %v388
        %v405 = vcvt.s32.f32 %v389
        %v406 = vcvt.s32.f32 %v390
        %v407 = vcvt.s32.f32 %v391
        %v408 = vcvt.s32.f32 %v392
        %v409 = vcvt.s32.f32 %v393
        %v410 = vcvt.s32.f32 %v394
        %v411 = vcvt.s32.f32 %v395
        %v412 = vcvt.s32.f32 %v396
        %v413 = vcvt.s32.f32 %v397
        %v414 = vcvt.s32.f32 %v398
        %v415 = vcvt.s32.f32 %v399
        %v416 = vcvt.s32.f32 %v400
        %v417 = vcvt.s32.f32 %v401
        %v418 = vlaneseq
        %v419 = vand.u32 %v418, 127
        %420 = vset.pattern.permute.xlu0 0
        %421 = vperm.xlu0 %420, %v320
        %v422 = vpop.permute.xlu0 %421
        %423 = vset.pattern.permute.xlu0 0
        %424 = vperm.xlu0 %423, %v321
        %v425 = vpop.permute.xlu0 %424
        %426 = vset.pattern.permute.xlu0 0
        %427 = vperm.xlu0 %426, %v322
        %v428 = vpop.permute.xlu0 %427
        %429 = vset.pattern.permute.xlu0 0
        %430 = vperm.xlu0 %429, %v323
        %v431 = vpop.permute.xlu0 %430
        %432 = vset.pattern.permute.xlu0 0
        %433 = vperm.xlu0 %432, %v324
        %v434 = vpop.permute.xlu0 %433
        %435 = vset.pattern.permute.xlu0 0
        %436 = vperm.xlu0 %435, %v325
        %v437 = vpop.permute.xlu0 %436
        %438 = vset.pattern.permute.xlu0 0
        %439 = vperm.xlu0 %438, %v326
        %v440 = vpop.permute.xlu0 %439
        %441 = vset.pattern.permute.xlu0 0
        %442 = vperm.xlu0 %441, %v327
        %v443 = vpop.permute.xlu0 %442
        %444 = vset.pattern.permute.xlu0 0
        %445 = vperm.xlu0 %444, %v328
        %v446 = vpop.permute.xlu0 %445
        %447 = vset.pattern.permute.xlu0 0
        %448 = vperm.xlu0 %447, %v329
        %v449 = vpop.permute.xlu0 %448
        %450 = vset.pattern.permute.xlu0 0
        %451 = vperm.xlu0 %450, %v330
        %v452 = vpop.permute.xlu0 %451
        %453 = vset.pattern.permute.xlu0 0
        %454 = vperm.xlu0 %453, %v331
        %v455 = vpop.permute.xlu0 %454
        %456 = vset.pattern.permute.xlu0 0
        %457 = vperm.xlu0 %456, %v332
        %v458 = vpop.permute.xlu0 %457
        %459 = vset.pattern.permute.xlu0 0
        %460 = vperm.xlu0 %459, %v333
        %v461 = vpop.permute.xlu0 %460
        %462 = vset.pattern.permute.xlu0 0
        %463 = vperm.xlu0 %462, %v334
        %v464 = vpop.permute.xlu0 %463
        %465 = vset.pattern.permute.xlu0 0
        %466 = vperm.xlu0 %465, %v335
        %v467 = vpop.permute.xlu0 %466
        %vm468 = vcmp.eq.s32.totalorder %v422, %v419
        %vm469 = vcmp.eq.s32.totalorder %v425, %v419
        %vm470 = vcmp.eq.s32.totalorder %v428, %v419
        %vm471 = vcmp.eq.s32.totalorder %v431, %v419
        %vm472 = vcmp.eq.s32.totalorder %v434, %v419
        %vm473 = vcmp.eq.s32.totalorder %v437, %v419
        %vm474 = vcmp.eq.s32.totalorder %v440, %v419
        %vm475 = vcmp.eq.s32.totalorder %v443, %v419
        %vm476 = vcmp.eq.s32.totalorder %v446, %v419
        %vm477 = vcmp.eq.s32.totalorder %v449, %v419
        %vm478 = vcmp.eq.s32.totalorder %v452, %v419
        %vm479 = vcmp.eq.s32.totalorder %v455, %v419
        %vm480 = vcmp.eq.s32.totalorder %v458, %v419
        %vm481 = vcmp.eq.s32.totalorder %v461, %v419
        %vm482 = vcmp.eq.s32.totalorder %v464, %v419
        %vm483 = vcmp.eq.s32.totalorder %v467, %v419
        %v484 = vsel %vm468, %v402, 0.0
        %v485 = vsel %vm469, %v403, 0.0
        %v486 = vsel %vm470, %v404, 0.0
        %v487 = vsel %vm471, %v405, 0.0
        %v488 = vsel %vm472, %v406, 0.0
        %v489 = vsel %vm473, %v407, 0.0
        %v490 = vsel %vm474, %v408, 0.0
        %v491 = vsel %vm475, %v409, 0.0
        %v492 = vsel %vm476, %v410, 0.0
        %v493 = vsel %vm477, %v411, 0.0
        %v494 = vsel %vm478, %v412, 0.0
        %v495 = vsel %vm479, %v413, 0.0
        %v496 = vsel %vm480, %v414, 0.0
        %v497 = vsel %vm481, %v415, 0.0
        %v498 = vsel %vm482, %v416, 0.0
        %v499 = vsel %vm483, %v417, 0.0
        %500 = vset.pattern.permute.xlu0 0
        %501 = vperm.xlu0 %500, %v336
        %v502 = vpop.permute.xlu0 %501
        %503 = vset.pattern.permute.xlu0 0
        %504 = vperm.xlu0 %503, %v337
        %v505 = vpop.permute.xlu0 %504
        %506 = vset.pattern.permute.xlu0 0
        %507 = vperm.xlu0 %506, %v338
        %v508 = vpop.permute.xlu0 %507
        %509 = vset.pattern.permute.xlu0 0
        %510 = vperm.xlu0 %509, %v339
        %v511 = vpop.permute.xlu0 %510
        %512 = vset.pattern.permute.xlu0 0
        %513 = vperm.xlu0 %512, %v340
        %v514 = vpop.permute.xlu0 %513
        %515 = vset.pattern.permute.xlu0 0
        %516 = vperm.xlu0 %515, %v341
        %v517 = vpop.permute.xlu0 %516
        %518 = vset.pattern.permute.xlu0 0
        %519 = vperm.xlu0 %518, %v342
        %v520 = vpop.permute.xlu0 %519
        %521 = vset.pattern.permute.xlu0 0
        %522 = vperm.xlu0 %521, %v343
        %v523 = vpop.permute.xlu0 %522
        %524 = vset.pattern.permute.xlu0 0
        %525 = vperm.xlu0 %524, %v344
        %v526 = vpop.permute.xlu0 %525
        %527 = vset.pattern.permute.xlu0 0
        %528 = vperm.xlu0 %527, %v345
        %v529 = vpop.permute.xlu0 %528
        %530 = vset.pattern.permute.xlu0 0
        %531 = vperm.xlu0 %530, %v346
        %v532 = vpop.permute.xlu0 %531
        %533 = vset.pattern.permute.xlu0 0
        %534 = vperm.xlu0 %533, %v347
        %v535 = vpop.permute.xlu0 %534
        %536 = vset.pattern.permute.xlu0 0
        %537 = vperm.xlu0 %536, %v348
        %v538 = vpop.permute.xlu0 %537
        %539 = vset.pattern.permute.xlu0 0
        %540 = vperm.xlu0 %539, %v349
        %v541 = vpop.permute.xlu0 %540
        %542 = vset.pattern.permute.xlu0 0
        %543 = vperm.xlu0 %542, %v350
        %v544 = vpop.permute.xlu0 %543
        %545 = vset.pattern.permute.xlu0 0
        %546 = vperm.xlu0 %545, %v351
        %v547 = vpop.permute.xlu0 %546
        %vm548 = vcmp.eq.s32.totalorder %v502, %v419
        %vm549 = vcmp.eq.s32.totalorder %v505, %v419
        %vm550 = vcmp.eq.s32.totalorder %v508, %v419
        %vm551 = vcmp.eq.s32.totalorder %v511, %v419
        %vm552 = vcmp.eq.s32.totalorder %v514, %v419
        %vm553 = vcmp.eq.s32.totalorder %v517, %v419
        %vm554 = vcmp.eq.s32.totalorder %v520, %v419
        %vm555 = vcmp.eq.s32.totalorder %v523, %v419
        %vm556 = vcmp.eq.s32.totalorder %v526, %v419
        %vm557 = vcmp.eq.s32.totalorder %v529, %v419
        %vm558 = vcmp.eq.s32.totalorder %v532, %v419
        %vm559 = vcmp.eq.s32.totalorder %v535, %v419
        %vm560 = vcmp.eq.s32.totalorder %v538, %v419
        %vm561 = vcmp.eq.s32.totalorder %v541, %v419
        %vm562 = vcmp.eq.s32.totalorder %v544, %v419
        %vm563 = vcmp.eq.s32.totalorder %v547, %v419
        %v564 = vsel %vm548, %v402, 0.0
        %v565 = vsel %vm549, %v403, 0.0
        %v566 = vsel %vm550, %v404, 0.0
        %v567 = vsel %vm551, %v405, 0.0
        %v568 = vsel %vm552, %v406, 0.0
        %v569 = vsel %vm553, %v407, 0.0
        %v570 = vsel %vm554, %v408, 0.0
        %v571 = vsel %vm555, %v409, 0.0
        %v572 = vsel %vm556, %v410, 0.0
        %v573 = vsel %vm557, %v411, 0.0
        %v574 = vsel %vm558, %v412, 0.0
        %v575 = vsel %vm559, %v413, 0.0
        %v576 = vsel %vm560, %v414, 0.0
        %v577 = vsel %vm561, %v415, 0.0
        %v578 = vsel %vm562, %v416, 0.0
        %v579 = vsel %vm563, %v417, 0.0
        %v580 = vld [vmem:[%s276] sm:$0xff]
        %v581 = vld [vmem:[%s276 + $0x8] sm:$0xff]
        %v582 = vld [vmem:[%s276 + $0x10] sm:$0xff]
        %v583 = vld [vmem:[%s276 + $0x18] sm:$0xff]
        %v584 = vld [vmem:[%s276 + $0x20] sm:$0xff]
        %v585 = vld [vmem:[%s276 + $0x28] sm:$0xff]
        %v586 = vld [vmem:[%s276 + $0x30] sm:$0xff]
        %v587 = vld [vmem:[%s276 + $0x38] sm:$0xff]
        %v588 = vld [vmem:[%s276 + $0x40] sm:$0xff]
        %v589 = vld [vmem:[%s276 + $0x48] sm:$0xff]
        %v590 = vld [vmem:[%s276 + $0x50] sm:$0xff]
        %v591 = vld [vmem:[%s276 + $0x58] sm:$0xff]
        %v592 = vld [vmem:[%s276 + $0x60] sm:$0xff]
        %v593 = vld [vmem:[%s276 + $0x68] sm:$0xff]
        %v594 = vld [vmem:[%s276 + $0x70] sm:$0xff]
        %v595 = vld [vmem:[%s276 + $0x78] sm:$0xff]
        %596 = vmatprep.subr.mxu0 0.0
        %597 = vmatpush1.msra.mxu0 %v580
        %598 = vmatprep.subr.mxu0 0.0
        %599 = vmatpush1.msra.mxu0 %v581
        %600 = vmatprep.subr.mxu0 0.0
        %601 = vmatpush1.msra.mxu0 %v582
        %602 = vmatprep.subr.mxu0 0.0
        %603 = vmatpush1.msra.mxu0 %v583
        %604 = vmatprep.subr.mxu0 0.0
        %605 = vmatpush1.msra.mxu0 %v584
        %606 = vmatprep.subr.mxu0 0.0
        %607 = vmatpush1.msra.mxu0 %v585
        %608 = vmatprep.subr.mxu0 0.0
        %609 = vmatpush1.msra.mxu0 %v586
        %610 = vmatprep.subr.mxu0 0.0
        %611 = vmatpush1.msra.mxu0 %v587
        %612 = vmatprep.subr.mxu0 0.0
        %613 = vmatpush1.msra.mxu0 %v588
        %614 = vmatprep.subr.mxu0 0.0
        %615 = vmatpush1.msra.mxu0 %v589
        %616 = vmatprep.subr.mxu0 0.0
        %617 = vmatpush1.msra.mxu0 %v590
        %618 = vmatprep.subr.mxu0 0.0
        %619 = vmatpush1.msra.mxu0 %v591
        %620 = vmatprep.subr.mxu0 0.0
        %621 = vmatpush1.msra.mxu0 %v592
        %622 = vmatprep.subr.mxu0 0.0
        %623 = vmatpush1.msra.mxu0 %v593
        %624 = vmatprep.subr.mxu0 0.0
        %625 = vmatpush1.msra.mxu0 %v594
        %626 = vmatprep.subr.mxu0 0.0
        %627 = vmatpush1.msra.mxu0 %v595
        %628 = vmatprep.subr.mxu0 0.0
        %629 = vmatpush1.msra.mxu0 0.0
        %630 = vmatprep.subr.mxu0 0.0
        %631 = vmatpush1.msra.mxu0 0.0
        %632 = vmatprep.subr.mxu0 0.0
        %633 = vmatpush1.msra.mxu0 0.0
        %634 = vmatprep.subr.mxu0 0.0
        %635 = vmatpush1.msra.mxu0 0.0
        %636 = vmatprep.subr.mxu0 0.0
        %637 = vmatpush1.msra.mxu0 0.0
        %638 = vmatprep.subr.mxu0 0.0
        %639 = vmatpush1.msra.mxu0 0.0
        %640 = vmatprep.subr.mxu0 0.0
        %641 = vmatpush1.msra.mxu0 0.0
        %642 = vmatprep.subr.mxu0 0.0
        %643 = vmatpush1.msra.mxu0 0.0
        %644 = vmatprep.subr.mxu0 0.0
        %645 = vmatpush1.msra.mxu0 0.0
        %646 = vmatprep.subr.mxu0 0.0
        %647 = vmatpush1.msra.mxu0 0.0
        %648 = vmatprep.subr.mxu0 0.0
        %649 = vmatpush1.msra.mxu0 0.0
        %650 = vmatprep.subr.mxu0 0.0
        %651 = vmatpush1.msra.mxu0 0.0
        %652 = vmatprep.subr.mxu0 0.0
        %653 = vmatpush1.msra.mxu0 0.0
        %654 = vmatprep.subr.mxu0 0.0
        %655 = vmatpush1.msra.mxu0 0.0
        %656 = vmatprep.subr.mxu0 0.0
        %657 = vmatpush1.msra.mxu0 0.0
        %658 = vmatprep.subr.mxu0 0.0
        %659 = vmatpush1.msra.mxu0 0.0
        %660 = vmatprep.mubr.f32.mxu0 0.0
        %661 = vmatmul.mubr.f32.gmra.mrb[0].mxu0 %v484
        %v662 = vpop.f32.mrb[0].mxu0
        %v663 = vadd.f32 0.0, %v662
        %v664 = vpop.f32.mrb[0].mxu0
        %665 = vmatprep.mubr.f32.mxu0 0.0
        %666 = vmatmul.mubr.f32.gmra.mrb[0].mxu0 %v485
        %v667 = vpop.f32.mrb[0].mxu0
        %v668 = vadd.f32 0.0, %v667
        %v669 = vpop.f32.mrb[0].mxu0
        %670 = vmatprep.mubr.f32.mxu0 0.0
        %671 = vmatmul.mubr.f32.gmra.mrb[0].mxu0 %v486
        %v672 = vpop.f32.mrb[0].mxu0
        %v673 = vadd.f32 0.0, %v672
        %v674 = vpop.f32.mrb[0].mxu0
        %675 = vmatprep.mubr.f32.mxu0 0.0
        %676 = vmatmul.mubr.f32.gmra.mrb[0].mxu0 %v487
        %v677 = vpop.f32.mrb[0].mxu0
        %v678 = vadd.f32 0.0, %v677
        %v679 = vpop.f32.mrb[0].mxu0
        %680 = vmatprep.mubr.f32.mxu0 0.0
        %681 = vmatmul.mubr.f32.gmra.mrb[0].mxu0 %v488
        %v682 = vpop.f32.mrb[0].mxu0
        %v683 = vadd.f32 0.0, %v682
        %v684 = vpop.f32.mrb[0].mxu0
        %685 = vmatprep.mubr.f32.mxu0 0.0
        %686 = vmatmul.mubr.f32.gmra.mrb[0].mxu0 %v489
        %v687 = vpop.f32.mrb[0].mxu0
        %v688 = vadd.f32 0.0, %v687
        %v689 = vpop.f32.mrb[0].mxu0
        %690 = vmatprep.mubr.f32.mxu0 0.0
        %691 = vmatmul.mubr.f32.gmra.mrb[0].mxu0 %v490
        %v692 = vpop.f32.mrb[0].mxu0
        %v693 = vadd.f32 0.0, %v692
        %v694 = vpop.f32.mrb[0].mxu0
        %695 = vmatprep.mubr.f32.mxu0 0.0
        %696 = vmatmul.mubr.f32.gmra.mrb[0].mxu0 %v491
        %v697 = vpop.f32.mrb[0].mxu0
        %v698 = vadd.f32 0.0, %v697
        %v699 = vpop.f32.mrb[0].mxu0
        %700 = vmatprep.mubr.f32.mxu0 0.0
        %701 = vmatmul.mubr.f32.gmra.mrb[0].mxu0 %v492
        %v702 = vpop.f32.mrb[0].mxu0
        %v703 = vadd.f32 0.0, %v702
        %v704 = vpop.f32.mrb[0].mxu0
        %705 = vmatprep.mubr.f32.mxu0 0.0
        %706 = vmatmul.mubr.f32.gmra.mrb[0].mxu0 %v493
        %v707 = vpop.f32.mrb[0].mxu0
        %v708 = vadd.f32 0.0, %v707
        %v709 = vpop.f32.mrb[0].mxu0
        %710 = vmatprep.mubr.f32.mxu0 0.0
        %711 = vmatmul.mubr.f32.gmra.mrb[0].mxu0 %v494
        %v712 = vpop.f32.mrb[0].mxu0
        %v713 = vadd.f32 0.0, %v712
        %v714 = vpop.f32.mrb[0].mxu0
        %715 = vmatprep.mubr.f32.mxu0 0.0
        %716 = vmatmul.mubr.f32.gmra.mrb[0].mxu0 %v495
        %v717 = vpop.f32.mrb[0].mxu0
        %v718 = vadd.f32 0.0, %v717
        %v719 = vpop.f32.mrb[0].mxu0
        %720 = vmatprep.mubr.f32.mxu0 0.0
        %721 = vmatmul.mubr.f32.gmra.mrb[0].mxu0 %v496
        %v722 = vpop.f32.mrb[0].mxu0
        %v723 = vadd.f32 0.0, %v722
        %v724 = vpop.f32.mrb[0].mxu0
        %725 = vmatprep.mubr.f32.mxu0 0.0
        %726 = vmatmul.mubr.f32.gmra.mrb[0].mxu0 %v497
        %v727 = vpop.f32.mrb[0].mxu0
        %v728 = vadd.f32 0.0, %v727
        %v729 = vpop.f32.mrb[0].mxu0
        %730 = vmatprep.mubr.f32.mxu0 0.0
        %731 = vmatmul.mubr.f32.gmra.mrb[0].mxu0 %v498
        %v732 = vpop.f32.mrb[0].mxu0
        %v733 = vadd.f32 0.0, %v732
        %v734 = vpop.f32.mrb[0].mxu0
        %735 = vmatprep.mubr.f32.mxu0 0.0
        %736 = vmatmul.mubr.f32.gmra.mrb[0].mxu0 %v499
        %v737 = vpop.f32.mrb[0].mxu0
        %v738 = vadd.f32 0.0, %v737
        %v739 = vpop.f32.mrb[0].mxu0
        %740 = vdwg.mxu0
        %v741 = vld [vmem:[%s281] sm:$0xff]
        %v742 = vld [vmem:[%s281 + $0x8] sm:$0xff]
        %v743 = vld [vmem:[%s281 + $0x10] sm:$0xff]
        %v744 = vld [vmem:[%s281 + $0x18] sm:$0xff]
        %v745 = vld [vmem:[%s281 + $0x20] sm:$0xff]
        %v746 = vld [vmem:[%s281 + $0x28] sm:$0xff]
        %v747 = vld [vmem:[%s281 + $0x30] sm:$0xff]
        %v748 = vld [vmem:[%s281 + $0x38] sm:$0xff]
        %v749 = vld [vmem:[%s281 + $0x40] sm:$0xff]
        %v750 = vld [vmem:[%s281 + $0x48] sm:$0xff]
        %v751 = vld [vmem:[%s281 + $0x50] sm:$0xff]
        %v752 = vld [vmem:[%s281 + $0x58] sm:$0xff]
        %v753 = vld [vmem:[%s281 + $0x60] sm:$0xff]
        %v754 = vld [vmem:[%s281 + $0x68] sm:$0xff]
        %v755 = vld [vmem:[%s281 + $0x70] sm:$0xff]
        %v756 = vld [vmem:[%s281 + $0x78] sm:$0xff]
        %757 = vmatprep.subr.mxu0 0.0
        %758 = vmatpush1.msra.mxu0 %v741
        %759 = vmatprep.subr.mxu0 0.0
        %760 = vmatpush1.msra.mxu0 %v742
        %761 = vmatprep.subr.mxu0 0.0
        %762 = vmatpush1.msra.mxu0 %v743
        %763 = vmatprep.subr.mxu0 0.0
        %764 = vmatpush1.msra.mxu0 %v744
        %765 = vmatprep.subr.mxu0 0.0
        %766 = vmatpush1.msra.mxu0 %v745
        %767 = vmatprep.subr.mxu0 0.0
        %768 = vmatpush1.msra.mxu0 %v746
        %769 = vmatprep.subr.mxu0 0.0
        %770 = vmatpush1.msra.mxu0 %v747
        %771 = vmatprep.subr.mxu0 0.0
        %772 = vmatpush1.msra.mxu0 %v748
        %773 = vmatprep.subr.mxu0 0.0
        %774 = vmatpush1.msra.mxu0 %v749
        %775 = vmatprep.subr.mxu0 0.0
        %776 = vmatpush1.msra.mxu0 %v750
        %777 = vmatprep.subr.mxu0 0.0
        %778 = vmatpush1.msra.mxu0 %v751
        %779 = vmatprep.subr.mxu0 0.0
        %780 = vmatpush1.msra.mxu0 %v752
        %781 = vmatprep.subr.mxu0 0.0
        %782 = vmatpush1.msra.mxu0 %v753
        %783 = vmatprep.subr.mxu0 0.0
        %784 = vmatpush1.msra.mxu0 %v754
        %785 = vmatprep.subr.mxu0 0.0
        %786 = vmatpush1.msra.mxu0 %v755
        %787 = vmatprep.subr.mxu0 0.0
        %788 = vmatpush1.msra.mxu0 %v756
        %789 = vmatprep.subr.mxu0 0.0
        %790 = vmatpush1.msra.mxu0 0.0
        %791 = vmatprep.subr.mxu0 0.0
        %792 = vmatpush1.msra.mxu0 0.0
        %793 = vmatprep.subr.mxu0 0.0
        %794 = vmatpush1.msra.mxu0 0.0
        %795 = vmatprep.subr.mxu0 0.0
        %796 = vmatpush1.msra.mxu0 0.0
        %797 = vmatprep.subr.mxu0 0.0
        %798 = vmatpush1.msra.mxu0 0.0
        %799 = vmatprep.subr.mxu0 0.0
        %800 = vmatpush1.msra.mxu0 0.0
        %801 = vmatprep.subr.mxu0 0.0
        %802 = vmatpush1.msra.mxu0 0.0
        %803 = vmatprep.subr.mxu0 0.0
        %804 = vmatpush1.msra.mxu0 0.0
        %805 = vmatprep.subr.mxu0 0.0
        %806 = vmatpush1.msra.mxu0 0.0
        %807 = vmatprep.subr.mxu0 0.0
        %808 = vmatpush1.msra.mxu0 0.0
        %809 = vmatprep.subr.mxu0 0.0
        %810 = vmatpush1.msra.mxu0 0.0
        %811 = vmatprep.subr.mxu0 0.0
        %812 = vmatpush1.msra.mxu0 0.0
        %813 = vmatprep.subr.mxu0 0.0
        %814 = vmatpush1.msra.mxu0 0.0
        %815 = vmatprep.subr.mxu0 0.0
        %816 = vmatpush1.msra.mxu0 0.0
        %817 = vmatprep.subr.mxu0 0.0
        %818 = vmatpush1.msra.mxu0 0.0
        %819 = vmatprep.subr.mxu0 0.0
        %820 = vmatpush1.msra.mxu0 0.0
        %821 = vmatprep.mubr.f32.mxu0 0.0
        %822 = vmatmul.mubr.f32.gmra.mrb[0].mxu0 %v564
        %v823 = vpop.f32.mrb[0].mxu0
        %v824 = vadd.f32 0.0, %v823
        %v825 = vpop.f32.mrb[0].mxu0
        %826 = vmatprep.mubr.f32.mxu0 0.0
        %827 = vmatmul.mubr.f32.gmra.mrb[0].mxu0 %v565
        %v828 = vpop.f32.mrb[0].mxu0
        %v829 = vadd.f32 0.0, %v828
        %v830 = vpop.f32.mrb[0].mxu0
        %831 = vmatprep.mubr.f32.mxu0 0.0
        %832 = vmatmul.mubr.f32.gmra.mrb[0].mxu0 %v566
        %v833 = vpop.f32.mrb[0].mxu0
        %v834 = vadd.f32 0.0, %v833
        %v835 = vpop.f32.mrb[0].mxu0
        %836 = vmatprep.mubr.f32.mxu0 0.0
        %837 = vmatmul.mubr.f32.gmra.mrb[0].mxu0 %v567
        %v838 = vpop.f32.mrb[0].mxu0
        %v839 = vadd.f32 0.0, %v838
        %v840 = vpop.f32.mrb[0].mxu0
        %841 = vmatprep.mubr.f32.mxu0 0.0
        %842 = vmatmul.mubr.f32.gmra.mrb[0].mxu0 %v568
        %v843 = vpop.f32.mrb[0].mxu0
        %v844 = vadd.f32 0.0, %v843
        %v845 = vpop.f32.mrb[0].mxu0
        %846 = vmatprep.mubr.f32.mxu0 0.0
        %847 = vmatmul.mubr.f32.gmra.mrb[0].mxu0 %v569
        %v848 = vpop.f32.mrb[0].mxu0
        %v849 = vadd.f32 0.0, %v848
        %v850 = vpop.f32.mrb[0].mxu0
        %851 = vmatprep.mubr.f32.mxu0 0.0
        %852 = vmatmul.mubr.f32.gmra.mrb[0].mxu0 %v570
        %v853 = vpop.f32.mrb[0].mxu0
        %v854 = vadd.f32 0.0, %v853
        %v855 = vpop.f32.mrb[0].mxu0
        %856 = vmatprep.mubr.f32.mxu0 0.0
        %857 = vmatmul.mubr.f32.gmra.mrb[0].mxu0 %v571
        %v858 = vpop.f32.mrb[0].mxu0
        %v859 = vadd.f32 0.0, %v858
        %v860 = vpop.f32.mrb[0].mxu0
        %861 = vmatprep.mubr.f32.mxu0 0.0
        %862 = vmatmul.mubr.f32.gmra.mrb[0].mxu0 %v572
        %v863 = vpop.f32.mrb[0].mxu0
        %v864 = vadd.f32 0.0, %v863
        %v865 = vpop.f32.mrb[0].mxu0
        %866 = vmatprep.mubr.f32.mxu0 0.0
        %867 = vmatmul.mubr.f32.gmra.mrb[0].mxu0 %v573
        %v868 = vpop.f32.mrb[0].mxu0
        %v869 = vadd.f32 0.0, %v868
        %v870 = vpop.f32.mrb[0].mxu0
        %871 = vmatprep.mubr.f32.mxu0 0.0
        %872 = vmatmul.mubr.f32.gmra.mrb[0].mxu0 %v574
        %v873 = vpop.f32.mrb[0].mxu0
        %v874 = vadd.f32 0.0, %v873
        %v875 = vpop.f32.mrb[0].mxu0
        %876 = vmatprep.mubr.f32.mxu0 0.0
        %877 = vmatmul.mubr.f32.gmra.mrb[0].mxu0 %v575
        %v878 = vpop.f32.mrb[0].mxu0
        %v879 = vadd.f32 0.0, %v878
        %v880 = vpop.f32.mrb[0].mxu0
        %881 = vmatprep.mubr.f32.mxu0 0.0
        %882 = vmatmul.mubr.f32.gmra.mrb[0].mxu0 %v576
        %v883 = vpop.f32.mrb[0].mxu0
        %v884 = vadd.f32 0.0, %v883
        %v885 = vpop.f32.mrb[0].mxu0
        %886 = vmatprep.mubr.f32.mxu0 0.0
        %887 = vmatmul.mubr.f32.gmra.mrb[0].mxu0 %v577
        %v888 = vpop.f32.mrb[0].mxu0
        %v889 = vadd.f32 0.0, %v888
        %v890 = vpop.f32.mrb[0].mxu0
        %891 = vmatprep.mubr.f32.mxu0 0.0
        %892 = vmatmul.mubr.f32.gmra.mrb[0].mxu0 %v578
        %v893 = vpop.f32.mrb[0].mxu0
        %v894 = vadd.f32 0.0, %v893
        %v895 = vpop.f32.mrb[0].mxu0
        %896 = vmatprep.mubr.f32.mxu0 0.0
        %897 = vmatmul.mubr.f32.gmra.mrb[0].mxu0 %v579
        %v898 = vpop.f32.mrb[0].mxu0
        %v899 = vadd.f32 0.0, %v898
        %v900 = vpop.f32.mrb[0].mxu0
        %901 = vdwg.mxu0
        %v902 = vld [vmem:[#allocation2] sm:$0xff]
        %v903 = vld [vmem:[#allocation2 + $0x8] sm:$0xff]
        %v904 = vld [vmem:[#allocation2 + $0x10] sm:$0xff]
        %v905 = vld [vmem:[#allocation2 + $0x18] sm:$0xff]
        %v906 = vld [vmem:[#allocation2 + $0x20] sm:$0xff]
        %v907 = vld [vmem:[#allocation2 + $0x28] sm:$0xff]
        %v908 = vld [vmem:[#allocation2 + $0x30] sm:$0xff]
        %v909 = vld [vmem:[#allocation2 + $0x38] sm:$0xff]
        %v910 = vld [vmem:[#allocation2 + $0x40] sm:$0xff]
        %v911 = vld [vmem:[#allocation2 + $0x48] sm:$0xff]
        %v912 = vld [vmem:[#allocation2 + $0x50] sm:$0xff]
        %v913 = vld [vmem:[#allocation2 + $0x58] sm:$0xff]
        %v914 = vld [vmem:[#allocation2 + $0x60] sm:$0xff]
        %v915 = vld [vmem:[#allocation2 + $0x68] sm:$0xff]
        %v916 = vld [vmem:[#allocation2 + $0x70] sm:$0xff]
        %v917 = vld [vmem:[#allocation2 + $0x78] sm:$0xff]
        %v918 = vsub.f32 %v663, %v824
        %v919 = vsub.f32 %v668, %v829
        %v920 = vsub.f32 %v673, %v834
        %v921 = vsub.f32 %v678, %v839
        %v922 = vsub.f32 %v683, %v844
        %v923 = vsub.f32 %v688, %v849
        %v924 = vsub.f32 %v693, %v854
        %v925 = vsub.f32 %v698, %v859
        %v926 = vsub.f32 %v703, %v864
        %v927 = vsub.f32 %v708, %v869
        %v928 = vsub.f32 %v713, %v874
        %v929 = vsub.f32 %v718, %v879
        %v930 = vsub.f32 %v723, %v884
        %v931 = vsub.f32 %v728, %v889
        %v932 = vsub.f32 %v733, %v894
        %v933 = vsub.f32 %v738, %v899
        %v934 = vand.u32 2147483647, %v918
        %v935 = vand.u32 2147483647, %v919
        %v936 = vand.u32 2147483647, %v920
        %v937 = vand.u32 2147483647, %v921
        %v938 = vand.u32 2147483647, %v922
        %v939 = vand.u32 2147483647, %v923
        %v940 = vand.u32 2147483647, %v924
        %v941 = vand.u32 2147483647, %v925
        %v942 = vand.u32 2147483647, %v926
        %v943 = vand.u32 2147483647, %v927
        %v944 = vand.u32 2147483647, %v928
        %v945 = vand.u32 2147483647, %v929
        %v946 = vand.u32 2147483647, %v930
        %v947 = vand.u32 2147483647, %v931
        %v948 = vand.u32 2147483647, %v932
        %v949 = vand.u32 2147483647, %v933
        %v950 = vadd.f32 %v902, %v934
        %v951 = vadd.f32 %v903, %v935
        %v952 = vadd.f32 %v904, %v936
        %v953 = vadd.f32 %v905, %v937
        %v954 = vadd.f32 %v906, %v938
        %v955 = vadd.f32 %v907, %v939
        %v956 = vadd.f32 %v908, %v940
        %v957 = vadd.f32 %v909, %v941
        %v958 = vadd.f32 %v910, %v942
        %v959 = vadd.f32 %v911, %v943
        %v960 = vadd.f32 %v912, %v944
        %v961 = vadd.f32 %v913, %v945
        %v962 = vadd.f32 %v914, %v946
        %v963 = vadd.f32 %v915, %v947
        %v964 = vadd.f32 %v916, %v948
        %v965 = vadd.f32 %v917, %v949
        %vm966 = vcmask 31744
        %967 = vst.msk [vmem:[#allocation2] sm:$0xff] %vm966, %v950
        %968 = vst.msk [vmem:[#allocation2 + $0x8] sm:$0xff] %vm966, %v951
        %969 = vst.msk [vmem:[#allocation2 + $0x10] sm:$0xff] %vm966, %v952
        %970 = vst.msk [vmem:[#allocation2 + $0x18] sm:$0xff] %vm966, %v953
        %971 = vst.msk [vmem:[#allocation2 + $0x20] sm:$0xff] %vm966, %v954
        %972 = vst.msk [vmem:[#allocation2 + $0x28] sm:$0xff] %vm966, %v955
        %973 = vst.msk [vmem:[#allocation2 + $0x30] sm:$0xff] %vm966, %v956
        %974 = vst.msk [vmem:[#allocation2 + $0x38] sm:$0xff] %vm966, %v957
        %975 = vst.msk [vmem:[#allocation2 + $0x40] sm:$0xff] %vm966, %v958
        %976 = vst.msk [vmem:[#allocation2 + $0x48] sm:$0xff] %vm966, %v959
        %977 = vst.msk [vmem:[#allocation2 + $0x50] sm:$0xff] %vm966, %v960
        %978 = vst.msk [vmem:[#allocation2 + $0x58] sm:$0xff] %vm966, %v961
        %979 = vst.msk [vmem:[#allocation2 + $0x60] sm:$0xff] %vm966, %v962
        %980 = vst.msk [vmem:[#allocation2 + $0x68] sm:$0xff] %vm966, %v963
        %981 = vst.msk [vmem:[#allocation2 + $0x70] sm:$0xff] %vm966, %v964
        %982 = vst.msk [vmem:[#allocation2 + $0x78] sm:$0xff] %vm966, %v965
        %984 = vset.pattern.permute.xlu0 3
        %985 = vperm.xlu0 %984, %v824
        %v986 = vpop.permute.xlu0 %985
        %989 = vset.pattern.permute.xlu0 3
        %990 = vperm.xlu0 %989, %v829
        %v991 = vpop.permute.xlu0 %990
        %994 = vset.pattern.permute.xlu0 3
        %995 = vperm.xlu0 %994, %v834
        %v996 = vpop.permute.xlu0 %995
        %999 = vset.pattern.permute.xlu0 3
        %1000 = vperm.xlu0 %999, %v839
        %v1001 = vpop.permute.xlu0 %1000
        %1004 = vset.pattern.permute.xlu0 3
        %1005 = vperm.xlu0 %1004, %v844
        %v1006 = vpop.permute.xlu0 %1005
        %1009 = vset.pattern.permute.xlu0 3
        %1010 = vperm.xlu0 %1009, %v849
        %v1011 = vpop.permute.xlu0 %1010
        %1014 = vset.pattern.permute.xlu0 3
        %1015 = vperm.xlu0 %1014, %v854
        %v1016 = vpop.permute.xlu0 %1015
        %1019 = vset.pattern.permute.xlu0 3
        %1020 = vperm.xlu0 %1019, %v859
        %v1021 = vpop.permute.xlu0 %1020
        %1024 = vset.pattern.permute.xlu0 3
        %1025 = vperm.xlu0 %1024, %v864
        %v1026 = vpop.permute.xlu0 %1025
        %1029 = vset.pattern.permute.xlu0 3
        %1030 = vperm.xlu0 %1029, %v869
        %v1031 = vpop.permute.xlu0 %1030
        %1034 = vset.pattern.permute.xlu0 3
        %1035 = vperm.xlu0 %1034, %v874
        %v1036 = vpop.permute.xlu0 %1035
        %1039 = vset.pattern.permute.xlu0 3
        %1040 = vperm.xlu0 %1039, %v879
        %v1041 = vpop.permute.xlu0 %1040
        %1044 = vset.pattern.permute.xlu0 3
        %1045 = vperm.xlu0 %1044, %v884
        %v1046 = vpop.permute.xlu0 %1045
        %1049 = vset.pattern.permute.xlu0 3
        %1050 = vperm.xlu0 %1049, %v889
        %v1051 = vpop.permute.xlu0 %1050
        %1054 = vset.pattern.permute.xlu0 3
        %1055 = vperm.xlu0 %1054, %v894
        %v1056 = vpop.permute.xlu0 %1055
        %1059 = vset.pattern.permute.xlu0 3
        %1060 = vperm.xlu0 %1059, %v899
        %v1061 = vpop.permute.xlu0 %1060
        %v1063 = vmul.f32 %v484, %v986
        %v1064 = vmul.f32 %v485, %v991
        %v1065 = vmul.f32 %v486, %v996
        %v1066 = vmul.f32 %v487, %v1001
        %v1067 = vmul.f32 %v488, %v1006
        %v1068 = vmul.f32 %v489, %v1011
        %v1069 = vmul.f32 %v490, %v1016
        %v1070 = vmul.f32 %v491, %v1021
        %v1071 = vmul.f32 %v492, %v1026
        %v1072 = vmul.f32 %v493, %v1031
        %v1073 = vmul.f32 %v494, %v1036
        %v1074 = vmul.f32 %v495, %v1041
        %v1075 = vmul.f32 %v496, %v1046
        %v1076 = vmul.f32 %v497, %v1051
        %v1077 = vmul.f32 %v498, %v1056
        %v1078 = vmul.f32 %v499, %v1061
        %v1079 = vadd.f32 %v1063, %v1064
        %v1080 = vadd.f32 %v1079, %v1065
        %v1081 = vadd.f32 %v1080, %v1066
        %v1082 = vadd.f32 %v1081, %v1067
        %v1083 = vadd.f32 %v1082, %v1068
        %v1084 = vadd.f32 %v1083, %v1069
        %v1085 = vadd.f32 %v1084, %v1070
        %v1086 = vadd.f32 %v1085, %v1071
        %v1087 = vadd.f32 %v1086, %v1072
        %v1088 = vadd.f32 %v1087, %v1073
        %v1089 = vadd.f32 %v1088, %v1074
        %v1090 = vadd.f32 %v1089, %v1075
        %v1091 = vadd.f32 %v1090, %v1076
        %v1092 = vadd.f32 %v1091, %v1077
        %v1093 = vadd.f32 %v1092, %v1078
        %v1094 = vrot.slane %v1093, 4
        %v1095 = vadd.f32 %v1093, %v1094
        %v1096 = vrot.slane %v1095, 2
        %v1097 = vadd.f32 %v1095, %v1096
        %v1098 = vrot.slane %v1097, 1
        %v1099 = vadd.f32 %v1097, %v1098
        %v1100 = vld [vmem:[%s271] sm:$0x1]
        %v1101 = vmax.f32 %v1100, 0.0
        %v1102 = vmul.f32 %v1100, %v1099
        %v1103 = vsub.f32 %v1101, %v1102
        %v1104 = vand.u32 2147483647, %v1100
        %v1105 = vsub.f32 0.0, %v1104
        %v1106 = vmul.f32 %v1105, 1.442695
        %v1107 = vpow.pop %v1106
        %v1108 = vadd.f32 %v1107, 1.0
        %v1109 = vlog2.pop %v1108
        %v1110 = vmul.f32 %v1109, 0.6931472
        %v1111 = vmul.f32 -0.5, %v1107
        %v1112 = vadd.f32 %v1111, 1.0
        %v1113 = vmul.f32 %v1112, %v1107
        %v1114 = vand.u32 2147483647, %v1107
        %vm1115 = vcmp.lt.f32.partialorder %v1114, 0.0004427343
        %v1116 = vsel %vm1115, %v1113, %v1110
        %v1117 = vadd.f32 %v1103, %v1116
        %v1118 = vxor.u32 %v1100, 2147483648
        %v1119 = vmul.f32 %v1118, 1.442695
        %v1120 = vpow.pop %v1119
        %v1121 = vadd.f32 %v1120, 1.0
        %v1122 = vrcp.pop %v1121
        %v1123 = vmul.f32 1.0, %v1122
        %v1124 = vsub.f32 1.0, %v1123
        %v1125 = vmul.f32 %v1099, 0.25
        %v1126 = vmul.f32 %v1125, %v1124
        %v1127 = vmul.f32 %v1126, %v1124
        %v1128 = vsub.f32 1.0, %v1099
        %v1129 = vmul.f32 %v1128, 0.75
        %v1130 = vmul.f32 %v1129, %v1123
        %v1131 = vmul.f32 %v1130, %v1123
        %v1132 = vadd.f32 %v1127, %v1131
        %vm1133 = vcmp.gt.f32.partialorder %v1100, 0.0
        %v1134 = vsel %vm1133, 1, 0
        %v1135 = vcvt.s32.f32 %v1134
        %vm1136 = vcmp.lt.s32.totalorder %v419, 16
        %v1137 = vsel %vm1136, 1, 0
        %v1138 = vcvt.s32.f32 %v1137
        %v1139 = vmul.f32 %v1117, %v1138
        %v1140 = vmul.f32 %v1132, %v1138
        %v1141 = vmul.f32 %v1135, %v1138
        %v1142 = vld [vmem:[#allocation3] sm:$0x1]
        %v1143 = vadd.f32 %v1142, %v1139
        %1144 = vst [vmem:[#allocation3] sm:$0x1] %v1143
        %v1145 = vld [vmem:[#allocation4] sm:$0x1]
        %v1146 = vadd.f32 %v1145, %v1140
        %1147 = vst [vmem:[#allocation4] sm:$0x1] %v1146
        %v1148 = vld [vmem:[#allocation5] sm:$0x1]
        %vm1149 = vcmask 1040384
        %v1150 = vsel %vm1149, %v1141, 0.0
        %1151 = vadd.xlane.f32.xlu0 %v1150
        %v1152 = vpop.xlane.xlu0 %1151
        %v1153 = vrot.slane %v1152, 4
        %v1154 = vadd.f32 %v1152, %v1153
        %v1155 = vrot.slane %v1154, 2
        %v1156 = vadd.f32 %v1154, %v1155
        %v1157 = vrot.slane %v1156, 1
        %v1158 = vadd.f32 %v1156, %v1157
        %s1159 = vtos %v1158
        %s1160 = ssub.f32 %s1159, %s319
        %s1161 = sand.u32 2147483647, %s1160
        %v1162 = vstv %s1161
        %v1163 = vadd.f32 %v1148, %v1162
        %vm1164 = vcmask 0
        %1165 = vst.msk [vmem:[#allocation5] sm:$0x1] %vm1164, %v1163
        %v1166 = vld [vmem:[#allocation6] sm:$0x1]
        %v1167 = vstv %s319
        %v1168 = vadd.f32 %v1166, %v1167
        %1169 = vst.msk [vmem:[#allocation6] sm:$0x1] %vm1164, %v1168
        %p1170 = scmp.eq.s32.totalorder %s24, 1
        // Predicated region
        $region45: #{tpu_custom_call.1} parent=39 // pred_check
          %p1171 = pneg %p1170
        $region46: #{tpu_custom_call.1} parent=39 // pred_check_branch
          %1173 = sbr.rel (%p1171) target = $region48
        $region47: #{tpu_custom_call.1} parent=39 // pred_region
          %v1174 = vld [vmem:[#allocation2] sm:$0xff]
          %v1175 = vld [vmem:[#allocation2 + $0x8] sm:$0xff]
          %v1176 = vld [vmem:[#allocation2 + $0x10] sm:$0xff]
          %v1177 = vld [vmem:[#allocation2 + $0x18] sm:$0xff]
          %v1178 = vld [vmem:[#allocation2 + $0x20] sm:$0xff]
          %v1179 = vld [vmem:[#allocation2 + $0x28] sm:$0xff]
          %v1180 = vld [vmem:[#allocation2 + $0x30] sm:$0xff]
          %v1181 = vld [vmem:[#allocation2 + $0x38] sm:$0xff]
          %v1182 = vld [vmem:[#allocation2 + $0x40] sm:$0xff]
          %v1183 = vld [vmem:[#allocation2 + $0x48] sm:$0xff]
          %v1184 = vld [vmem:[#allocation2 + $0x50] sm:$0xff]
          %v1185 = vld [vmem:[#allocation2 + $0x58] sm:$0xff]
          %v1186 = vld [vmem:[#allocation2 + $0x60] sm:$0xff]
          %v1187 = vld [vmem:[#allocation2 + $0x68] sm:$0xff]
          %v1188 = vld [vmem:[#allocation2 + $0x70] sm:$0xff]
          %v1189 = vld [vmem:[#allocation2 + $0x78] sm:$0xff]
          %v1190 = vld [vmem:[#allocation6] sm:$0x1]
          %v1191 = vadd.f32 %v1190, 0.0
          %s1192 = vtos %v1191
          %s1193 = smax.f32 %s1192, 1.0
          %v1194 = vstv %s1193
          %v1195 = vrcp.pop %v1194
          %s1196 = vtos %v1195
          %vm1197 = vcmask 7168
          %v1198 = vsel %vm1197, %v1174, 0.0
          %v1199 = vsel %vm1197, %v1175, 0.0
          %v1200 = vadd.f32 %v1198, %v1199
          %v1201 = vsel %vm1197, %v1176, 0.0
          %v1202 = vadd.f32 %v1200, %v1201
          %v1203 = vsel %vm1197, %v1177, 0.0
          %v1204 = vadd.f32 %v1202, %v1203
          %v1205 = vsel %vm1197, %v1178, 0.0
          %v1206 = vadd.f32 %v1204, %v1205
          %v1207 = vsel %vm1197, %v1179, 0.0
          %v1208 = vadd.f32 %v1206, %v1207
          %v1209 = vsel %vm1197, %v1180, 0.0
          %v1210 = vadd.f32 %v1208, %v1209
          %v1211 = vsel %vm1197, %v1181, 0.0
          %v1212 = vadd.f32 %v1210, %v1211
          %v1213 = vsel %vm1197, %v1182, 0.0
          %v1214 = vadd.f32 %v1212, %v1213
          %v1215 = vsel %vm1197, %v1183, 0.0
          %v1216 = vadd.f32 %v1214, %v1215
          %v1217 = vsel %vm1197, %v1184, 0.0
          %v1218 = vadd.f32 %v1216, %v1217
          %v1219 = vsel %vm1197, %v1185, 0.0
          %v1220 = vadd.f32 %v1218, %v1219
          %v1221 = vsel %vm1197, %v1186, 0.0
          %v1222 = vadd.f32 %v1220, %v1221
          %v1223 = vsel %vm1197, %v1187, 0.0
          %v1224 = vadd.f32 %v1222, %v1223
          %v1225 = vsel %vm1197, %v1188, 0.0
          %v1226 = vadd.f32 %v1224, %v1225
          %v1227 = vsel %vm1197, %v1189, 0.0
          %v1228 = vadd.f32 %v1226, %v1227
          %1229 = vadd.xlane.f32.xlu0 %v1228
          %v1230 = vpop.xlane.xlu0 %1229
          %v1231 = vrot.slane %v1230, 4
          %v1232 = vadd.f32 %v1230, %v1231
          %v1233 = vrot.slane %v1232, 2
          %v1234 = vadd.f32 %v1232, %v1233
          %v1235 = vrot.slane %v1234, 1
          %v1236 = vadd.f32 %v1234, %v1235
          %s1237 = vtos %v1236
          %s1238 = smul.f32 %s1237, %s1196
          %1255 = vrot.lane.b32.xlu0 %v1174, 127
          %v1256 = vpop.permute.xlu0 %1255
          %1257 = vrot.lane.b32.xlu0 %v1175, 127
          %v1258 = vpop.permute.xlu0 %1257
          %1259 = vrot.lane.b32.xlu0 %v1176, 127
          %v1260 = vpop.permute.xlu0 %1259
          %1261 = vrot.lane.b32.xlu0 %v1177, 127
          %v1262 = vpop.permute.xlu0 %1261
          %1263 = vrot.lane.b32.xlu0 %v1178, 127
          %v1264 = vpop.permute.xlu0 %1263
          %1265 = vrot.lane.b32.xlu0 %v1179, 127
          %v1266 = vpop.permute.xlu0 %1265
          %1267 = vrot.lane.b32.xlu0 %v1180, 127
          %v1268 = vpop.permute.xlu0 %1267
          %1269 = vrot.lane.b32.xlu0 %v1181, 127
          %v1270 = vpop.permute.xlu0 %1269
          %1271 = vrot.lane.b32.xlu0 %v1182, 127
          %v1272 = vpop.permute.xlu0 %1271
          %1273 = vrot.lane.b32.xlu0 %v1183, 127
          %v1274 = vpop.permute.xlu0 %1273
          %1275 = vrot.lane.b32.xlu0 %v1184, 127
          %v1276 = vpop.permute.xlu0 %1275
          %1277 = vrot.lane.b32.xlu0 %v1185, 127
          %v1278 = vpop.permute.xlu0 %1277
          %1279 = vrot.lane.b32.xlu0 %v1186, 127
          %v1280 = vpop.permute.xlu0 %1279
          %1281 = vrot.lane.b32.xlu0 %v1187, 127
          %v1282 = vpop.permute.xlu0 %1281
          %1283 = vrot.lane.b32.xlu0 %v1188, 127
          %v1284 = vpop.permute.xlu0 %1283
          %1285 = vrot.lane.b32.xlu0 %v1189, 127
          %v1286 = vpop.permute.xlu0 %1285
          %v1303 = vsel %vm1197, %v1256, 0.0
          %v1304 = vsel %vm1197, %v1258, 0.0
          %v1305 = vadd.f32 %v1303, %v1304
          %v1306 = vsel %vm1197, %v1260, 0.0
          %v1307 = vadd.f32 %v1305, %v1306
          %v1308 = vsel %vm1197, %v1262, 0.0
          %v1309 = vadd.f32 %v1307, %v1308
          %v1310 = vsel %vm1197, %v1264, 0.0
          %v1311 = vadd.f32 %v1309, %v1310
          %v1312 = vsel %vm1197, %v1266, 0.0
          %v1313 = vadd.f32 %v1311, %v1312
          %v1314 = vsel %vm1197, %v1268, 0.0
          %v1315 = vadd.f32 %v1313, %v1314
          %v1316 = vsel %vm1197, %v1270, 0.0
          %v1317 = vadd.f32 %v1315, %v1316
          %v1318 = vsel %vm1197, %v1272, 0.0
          %v1319 = vadd.f32 %v1317, %v1318
          %v1320 = vsel %vm1197, %v1274, 0.0
          %v1321 = vadd.f32 %v1319, %v1320
          %v1322 = vsel %vm1197, %v1276, 0.0
          %v1323 = vadd.f32 %v1321, %v1322
          %v1324 = vsel %vm1197, %v1278, 0.0
          %v1325 = vadd.f32 %v1323, %v1324
          %v1326 = vsel %vm1197, %v1280, 0.0
          %v1327 = vadd.f32 %v1325, %v1326
          %v1328 = vsel %vm1197, %v1282, 0.0
          %v1329 = vadd.f32 %v1327, %v1328
          %v1330 = vsel %vm1197, %v1284, 0.0
          %v1331 = vadd.f32 %v1329, %v1330
          %v1332 = vsel %vm1197, %v1286, 0.0
          %v1333 = vadd.f32 %v1331, %v1332
          %1334 = vadd.xlane.f32.xlu0 %v1333
          %v1335 = vpop.xlane.xlu0 %1334
          %v1336 = vrot.slane %v1335, 4
          %v1337 = vadd.f32 %v1335, %v1336
          %v1338 = vrot.slane %v1337, 2
          %v1339 = vadd.f32 %v1337, %v1338
          %v1340 = vrot.slane %v1339, 1
          %v1341 = vadd.f32 %v1339, %v1340
          %s1342 = vtos %v1341
          %s1343 = smul.f32 %s1342, %s1196
          %1344 = vrot.lane.b32.xlu0 %v1174, 126
          %v1345 = vpop.permute.xlu0 %1344
          %1346 = vrot.lane.b32.xlu0 %v1175, 126
          %v1347 = vpop.permute.xlu0 %1346
          %1348 = vrot.lane.b32.xlu0 %v1176, 126
          %v1349 = vpop.permute.xlu0 %1348
          %1350 = vrot.lane.b32.xlu0 %v1177, 126
          %v1351 = vpop.permute.xlu0 %1350
          %1352 = vrot.lane.b32.xlu0 %v1178, 126
          %v1353 = vpop.permute.xlu0 %1352
          %1354 = vrot.lane.b32.xlu0 %v1179, 126
          %v1355 = vpop.permute.xlu0 %1354
          %1356 = vrot.lane.b32.xlu0 %v1180, 126
          %v1357 = vpop.permute.xlu0 %1356
          %1358 = vrot.lane.b32.xlu0 %v1181, 126
          %v1359 = vpop.permute.xlu0 %1358
          %1360 = vrot.lane.b32.xlu0 %v1182, 126
          %v1361 = vpop.permute.xlu0 %1360
          %1362 = vrot.lane.b32.xlu0 %v1183, 126
          %v1363 = vpop.permute.xlu0 %1362
          %1364 = vrot.lane.b32.xlu0 %v1184, 126
          %v1365 = vpop.permute.xlu0 %1364
          %1366 = vrot.lane.b32.xlu0 %v1185, 126
          %v1367 = vpop.permute.xlu0 %1366
          %1368 = vrot.lane.b32.xlu0 %v1186, 126
          %v1369 = vpop.permute.xlu0 %1368
          %1370 = vrot.lane.b32.xlu0 %v1187, 126
          %v1371 = vpop.permute.xlu0 %1370
          %1372 = vrot.lane.b32.xlu0 %v1188, 126
          %v1373 = vpop.permute.xlu0 %1372
          %1374 = vrot.lane.b32.xlu0 %v1189, 126
          %v1375 = vpop.permute.xlu0 %1374
          %v1392 = vsel %vm1197, %v1345, 0.0
          %v1393 = vsel %vm1197, %v1347, 0.0
          %v1394 = vadd.f32 %v1392, %v1393
          %v1395 = vsel %vm1197, %v1349, 0.0
          %v1396 = vadd.f32 %v1394, %v1395
          %v1397 = vsel %vm1197, %v1351, 0.0
          %v1398 = vadd.f32 %v1396, %v1397
          %v1399 = vsel %vm1197, %v1353, 0.0
          %v1400 = vadd.f32 %v1398, %v1399
          %v1401 = vsel %vm1197, %v1355, 0.0
          %v1402 = vadd.f32 %v1400, %v1401
          %v1403 = vsel %vm1197, %v1357, 0.0
          %v1404 = vadd.f32 %v1402, %v1403
          %v1405 = vsel %vm1197, %v1359, 0.0
          %v1406 = vadd.f32 %v1404, %v1405
          %v1407 = vsel %vm1197, %v1361, 0.0
          %v1408 = vadd.f32 %v1406, %v1407
          %v1409 = vsel %vm1197, %v1363, 0.0
          %v1410 = vadd.f32 %v1408, %v1409
          %v1411 = vsel %vm1197, %v1365, 0.0
          %v1412 = vadd.f32 %v1410, %v1411
          %v1413 = vsel %vm1197, %v1367, 0.0
          %v1414 = vadd.f32 %v1412, %v1413
          %v1415 = vsel %vm1197, %v1369, 0.0
          %v1416 = vadd.f32 %v1414, %v1415
          %v1417 = vsel %vm1197, %v1371, 0.0
          %v1418 = vadd.f32 %v1416, %v1417
          %v1419 = vsel %vm1197, %v1373, 0.0
          %v1420 = vadd.f32 %v1418, %v1419
          %v1421 = vsel %vm1197, %v1375, 0.0
          %v1422 = vadd.f32 %v1420, %v1421
          %1423 = vadd.xlane.f32.xlu0 %v1422
          %v1424 = vpop.xlane.xlu0 %1423
          %v1425 = vrot.slane %v1424, 4
          %v1426 = vadd.f32 %v1424, %v1425
          %v1427 = vrot.slane %v1426, 2
          %v1428 = vadd.f32 %v1426, %v1427
          %v1429 = vrot.slane %v1428, 1
          %v1430 = vadd.f32 %v1428, %v1429
          %s1431 = vtos %v1430
          %s1432 = smul.f32 %s1431, %s1196
          %v1433 = vld [vmem:[#allocation3] sm:$0x1]
          %v1434 = vsel %vm1149, %v1433, 0.0
          %1435 = vadd.xlane.f32.xlu0 %v1434
          %v1436 = vpop.xlane.xlu0 %1435
          %v1437 = vrot.slane %v1436, 4
          %v1438 = vadd.f32 %v1436, %v1437
          %v1439 = vrot.slane %v1438, 2
          %v1440 = vadd.f32 %v1438, %v1439
          %v1441 = vrot.slane %v1440, 1
          %v1442 = vadd.f32 %v1440, %v1441
          %s1443 = vtos %v1442
          %s1444 = smul.f32 %s1443, 0.03125
          %v1445 = vld [vmem:[#allocation4] sm:$0x1]
          %v1446 = vsel %vm1149, %v1445, 0.0
          %1447 = vadd.xlane.f32.xlu0 %v1446
          %v1448 = vpop.xlane.xlu0 %1447
          %v1449 = vrot.slane %v1448, 4
          %v1450 = vadd.f32 %v1448, %v1449
          %v1451 = vrot.slane %v1450, 2
          %v1452 = vadd.f32 %v1450, %v1451
          %v1453 = vrot.slane %v1452, 1
          %v1454 = vadd.f32 %v1452, %v1453
          %s1455 = vtos %v1454
          %s1456 = smul.f32 %s1455, 0.03125
          %s1457 = smul.f32 %s1456, %s1444
          %v1458 = vld [vmem:[#allocation5] sm:$0x1]
          %v1459 = vadd.f32 %v1458, 0.0
          %s1460 = vtos %v1459
          %s1461 = smul.f32 %s1460, 0.5
          %s1462 = scalar_lea.smem [#allocation9], 0
          %1463 = sst [smem:[%s1462]] %s1432
          %s1464 = scalar_lea.smem [#allocation9], 1
          %1465 = sst [smem:[%s1464]] %s1457
          %s1466 = scalar_lea.smem [#allocation9], 2
          %1467 = sst [smem:[%s1466]] %s1461
          %s1468 = scalar_lea.smem [#allocation9], 3
          %1469 = sst [smem:[%s1468]] %s1432
          %s1470 = scalar_lea.smem [#allocation9], 4
          %1471 = sst [smem:[%s1470]] %s1238
          %s1472 = scalar_lea.smem [#allocation9], 5
          %1473 = sst [smem:[%s1472]] %s1343
        $region48: #{tpu_custom_call.1} parent=39 // pred_fallthru
          _
        // Predicated region
        $region49: #{tpu_custom_call.1} parent=39 // pred_check
          %p1474 = pneg %p167
        $region50: #{tpu_custom_call.1} parent=39 // pred_check_branch
          %1476 = sbr.rel (%p1474) target = $region52
        $region51: #{tpu_custom_call.1} parent=39 // pred_region
          %s1478 = ssub.s32 16, 16
          %1479 = vsyncadd [#allocation10], %s1478
          %1482 = dma.smem_to_hbm [#allocation9], 16, %s6, [#allocation10]
        $region52: #{tpu_custom_call.1} parent=39 // pred_fallthru
          _
        // Predicated region
        $region53: #{tpu_custom_call.1} parent=39 // pred_check
          %p1483 = pneg %p167
        $region54: #{tpu_custom_call.1} parent=39 // pred_check_branch
          %1485 = sbr.rel (%p1483) target = $region56
        $region55: #{tpu_custom_call.1} parent=39 // pred_region
          %1486 = dma.done [#allocation10], 16
        $region56: #{tpu_custom_call.1} parent=39 // pred_fallthru
          _
        %1487 = sfence
      $region40: #{tpu_custom_call.1} parent=5 // pred_fallthru
        _
      %p1488 = scmp.le.s32.totalorder 2, %s19
      // Predicated region
      $region57: #{tpu_custom_call.1} parent=5 // pred_check
        %p1489 = pneg %p1488
      $region58: #{tpu_custom_call.1} parent=5 // pred_check_branch
        %1491 = sbr.rel (%p1489) target = $region60
      $region59: #{tpu_custom_call.1} parent=5 // pred_region
        %s1492 = ssub.s32 %s19, 2
      $region60: #{tpu_custom_call.1} parent=5 // pred_fallthru
        _
    $region6: #{tpu_custom_call.1} parent=1 // loop_footer
      %s23 = sadd.s32 1, %s19
    $region7: #{tpu_custom_call.1} parent=1 // loop_footer_branch
      %18 = sbr.rel target = $region3
    $region8: #{tpu_custom_call.1} parent=1 // loop_exit
      _
    %1493 = vsyncpa [#allocation10], 1
    %s1494 = scalar_lea.sflag [#allocation10], 1
    %1495 = vsyncpa %s1494, 1

</llo_original>
